<compile_context>
chip_gen: v5e
topology: v5e:2x2
jax: 0.10.0
libtpu: 0.0.40
codegen_flags: <defaults>
</compile_context>

<pallas_src>
import functools

import jax
import jax.numpy as jnp
from jax.experimental import pallas as pl
from jax.experimental.pallas import tpu as pltpu

NEG_INF = -1e30      # additive mask value for non-edges
MASK_SCALE = 1e30    # bias = (adj - 1) * MASK_SCALE  ->  0 on edges, -1e30 off


def _pick_exp_dtype():
    """bf16 exp on v6e/v7x (bf16 EUP/VPU); f32 on v5e and older."""
    try:
        kind = jax.devices()[0].device_kind.lower()
    except Exception:
        return jnp.float32
    if ("v6" in kind) or ("v7" in kind) or ("7x" in kind):
        return jnp.bfloat16
    return jnp.float32


_EXP_DTYPE = _pick_exp_dtype()


def _round_up(v, m):
    return ((v + m - 1) // m) * m


def _tiles(n):
    """Returns (padded_n, row_tile, col_tile)."""
    if n <= 512:
        npad = max(8, _round_up(n, 8))
        return npad, npad, npad          # single block
    npad = _round_up(n, 512)
    return npad, 256, 512                # flash-style tiling


# ----------------------------------------------------------------------------
# Kernel A: conv1 feature projection + attention logits (grid over row blocks)
# ----------------------------------------------------------------------------
def _gat1_proj_kernel(x_ref, w_ref, att_ref, h_ref, a_src_ref, a_dst_ref, *,
                      heads):
    h = jnp.dot(x_ref[...], w_ref[...], preferred_element_type=jnp.float32)
    h_bf = h.astype(jnp.bfloat16)
    # Packed block-diag att matrix -> all per-head src|dst logits in one dot.
    a = jnp.dot(h_bf, att_ref[...], preferred_element_type=jnp.float32)  # [tr, 2H]
    h_ref_out = h_bf
    h_ref[...] = h_ref_out
    a_src_ref[...] = a[:, :heads].T          # stored [H, N]: row layout for cols
    a_dst_ref[...] = a[:, heads:]            # stored [N, H]


# ----------------------------------------------------------------------------
# Kernel B: conv1 attention (flash softmax, 4 heads) + ReLU + conv2 projection
#   grid = (row blocks [parallel], source-col blocks [arbitrary])
# ----------------------------------------------------------------------------
def _gat1_attn_kernel(adj_ref, a_dst_ref, a_src_ref, h_ref, b1_ref,
                      w2_ref, att2_ref,
                      h2_ref, a_src2_ref, a_dst2_ref,
                      m_ref, l_ref, acc_ref, *, heads, f_out, exp_dtype):
    j = pl.program_id(1)

    @pl.when(j == 0)
    def _():
        m_ref[...] = jnp.full_like(m_ref, -jnp.inf)
        l_ref[...] = jnp.zeros_like(l_ref)
        acc_ref[...] = jnp.zeros_like(acc_ref)

    # 0 / -1e30 additive mask bias built per block from the int8 adjacency
    # (convert + FMA), shared by all heads.
    bias = (adj_ref[...].astype(jnp.float32) - 1.0) * jnp.float32(MASK_SCALE)

    a_dst = a_dst_ref[...]       # [tr, H]  f32
    a_src = a_src_ref[...]       # [H, tc]  f32
    h_cols = h_ref[...]          # [tc, H*F] bf16

    for head in range(heads):
        lo = head * f_out
        e = a_dst[:, head:head + 1] + a_src[head:head + 1, :]      # [tr, tc]
        e = jnp.maximum(e, 0.2 * e)                                # leaky ReLU
        e = e + bias
        m_prev = m_ref[:, head:head + 1]
        m_new = jnp.maximum(m_prev, jnp.max(e, axis=-1, keepdims=True))
        alpha = jnp.exp(m_prev - m_new)                            # [tr, 1]
        p = jnp.exp((e - m_new).astype(exp_dtype))                 # bf16 on v6/v7
        l_ref[:, head:head + 1] = (alpha * l_ref[:, head:head + 1]
                                   + jnp.sum(p.astype(jnp.float32), axis=-1,
                                             keepdims=True))
        acc_ref[:, lo:lo + f_out] = (
            alpha * acc_ref[:, lo:lo + f_out]
            + jnp.dot(p.astype(jnp.bfloat16), h_cols[:, lo:lo + f_out],
                      preferred_element_type=jnp.float32))
        m_ref[:, head:head + 1] = m_new

    @pl.when(j == pl.num_programs(1) - 1)
    def _():
        # Normalize (approx reciprocal on the EUP), add bias, ReLU -> then run
        # the conv2 feature projection + its attention logits right here, so
        # the hidden [N, 128] activation never touches HBM.
        inv = pl.reciprocal(l_ref[...], approx=True)               # [tr, H]
        b1 = b1_ref[...]
        for head in range(heads):
            lo = head * f_out
            acc_ref[:, lo:lo + f_out] = (acc_ref[:, lo:lo + f_out]
                                         * inv[:, head:head + 1]
                                         + b1[:, lo:lo + f_out])
        x1 = jnp.maximum(acc_ref[...], 0.0).astype(jnp.bfloat16)   # [tr, H*F]
        h2 = jnp.dot(x1, w2_ref[...], preferred_element_type=jnp.float32)
        h2_bf = h2.astype(jnp.bfloat16)
        a2 = jnp.dot(h2_bf, att2_ref[...], preferred_element_type=jnp.float32)
        h2_ref[...] = h2_bf
        a_src2_ref[...] = a2[:, 0:1].T                             # [1, tr]
        a_dst2_ref[...] = a2[:, 1:2]                               # [tr, 1]


# ----------------------------------------------------------------------------
# Kernel C: conv2 attention (flash softmax, 1 head) + fused Linear (fc)
#   grid = (row blocks [parallel], source-col blocks [arbitrary])
# ----------------------------------------------------------------------------
def _gat2_attn_fc_kernel(adj_ref, a_dst_ref, a_src_ref, h_ref, b2_ref,
                         fcw_ref, fcb_ref, out_ref,
                         m_ref, l_ref, acc_ref, *, exp_dtype):
    j = pl.program_id(1)

    @pl.when(j == 0)
    def _():
        m_ref[...] = jnp.full_like(m_ref, -jnp.inf)
        l_ref[...] = jnp.zeros_like(l_ref)
        acc_ref[...] = jnp.zeros_like(acc_ref)

    bias = (adj_ref[...].astype(jnp.float32) - 1.0) * jnp.float32(MASK_SCALE)
    e = a_dst_ref[...] + a_src_ref[...]                            # [tr, tc]
    e = jnp.maximum(e, 0.2 * e) + bias
    m_prev = m_ref[...]
    m_new = jnp.maximum(m_prev, jnp.max(e, axis=-1, keepdims=True))
    alpha = jnp.exp(m_prev - m_new)
    p = jnp.exp((e - m_new).astype(exp_dtype))
    l_ref[...] = alpha * l_ref[...] + jnp.sum(p.astype(jnp.float32), axis=-1,
                                              keepdims=True)
    acc_ref[...] = alpha * acc_ref[...] + jnp.dot(
        p.astype(jnp.bfloat16), h_ref[...], preferred_element_type=jnp.float32)
    m_ref[...] = m_new

    @pl.when(j == pl.num_programs(1) - 1)
    def _():
        inv = pl.reciprocal(l_ref[...], approx=True)
        y = (acc_ref[...] * inv + b2_ref[...]).astype(jnp.bfloat16)
        # Fused fc: single lane-dense [tr, 128] f32 store.
        out_ref[...] = jnp.dot(y, fcw_ref[...],
                               preferred_element_type=jnp.float32) + fcb_ref[...]


# ----------------------------------------------------------------------------
# Wrapper
# ----------------------------------------------------------------------------
def _pack_att(att_src, att_dst, f_stride):
    """[H, F] att vectors -> block-diagonal [H*f_stride, 2H] so h @ m gives
    [a_src | a_dst] for all heads in one dot (MXU work, frees VPU/XLU)."""
    heads, f_out = att_src.shape
    m = jnp.zeros((heads * f_stride, 2 * heads), jnp.float32)
    for h in range(heads):
        m = m.at[h * f_stride:h * f_stride + f_out, h].set(att_src[h])
        m = m.at[h * f_stride:h * f_stride + f_out, heads + h].set(att_dst[h])
    return m


def _cparams(sem, step_bytes):
    return pltpu.CompilerParams(
        dimension_semantics=sem,
        vmem_limit_bytes=int(min(max(2 * step_bytes + (2 << 20), 8 << 20),
                                 64 << 20)))


@jax.jit
def gat_model_forward(x, adj, params):
    n, f_in = x.shape
    heads1, f1 = params["att_src1"].shape
    hf1 = heads1 * f1
    out_dim = params["fc_w"].shape[1]
    f2p = _round_up(max(out_dim, 128), 128)          # lane-dense padded width
    npad, tr, tc = _tiles(n)
    gi, gj = npad // tr, npad // tc

    bf16, f32 = jnp.bfloat16, jnp.float32

    # ---- operand prep (node axis zero-padded to npad) -----------------------
    x_p = jnp.zeros((npad, f_in), f32).at[:n, :].set(x).astype(bf16)
    adj_i8 = jnp.zeros((npad, npad), jnp.int8).at[:n, :n].set(
        (adj > 0).astype(jnp.int8))                  # 1-byte mask (review item)

    w1_bf = params["w1"].astype(bf16)
    att1_bf = _pack_att(params["att_src1"], params["att_dst1"], f1).astype(bf16)
    b1 = params["b1"].reshape(1, hf1).astype(f32)

    w2_bf = jnp.zeros((hf1, f2p), f32).at[:, :out_dim].set(
        params["w2"]).astype(bf16)
    att2_bf = _pack_att(params["att_src2"], params["att_dst2"], f2p).astype(bf16)
    b2 = jnp.zeros((1, f2p), f32).at[0, :out_dim].set(params["b2"])
    fcw_bf = jnp.zeros((f2p, f2p), f32).at[:out_dim, :out_dim].set(
        params["fc_w"]).astype(bf16)
    fcb = jnp.zeros((1, f2p), f32).at[0, :out_dim].set(params["fc_b"])

    # ---- kernel A: conv1 projection + logits --------------------------------
    step_a = (tr * f_in * 2 + f_in * hf1 * 2 + hf1 * 2 * heads1 * 2
              + tr * hf1 * 6 + tr * heads1 * 8)
    h1, a_src1, a_dst1 = pl.pallas_call(
        functools.partial(_gat1_proj_kernel, heads=heads1),
        grid=(gi,),
        in_specs=[pl.BlockSpec((tr, f_in), lambda i: (i, 0)),
                  pl.BlockSpec((f_in, hf1), lambda i: (0, 0)),
                  pl.BlockSpec((hf1, 2 * heads1), lambda i: (0, 0))],
        out_specs=(pl.BlockSpec((tr, hf1), lambda i: (i, 0)),
                   pl.BlockSpec((heads1, tr), lambda i: (0, i)),
                   pl.BlockSpec((tr, heads1), lambda i: (i, 0))),
        out_shape=(jax.ShapeDtypeStruct((npad, hf1), bf16),
                   jax.ShapeDtypeStruct((heads1, npad), f32),
                   jax.ShapeDtypeStruct((npad, heads1), f32)),
        compiler_params=_cparams(("parallel",), step_a),
    )(x_p, w1_bf, att1_bf)

    # ---- kernel B: conv1 attention + ReLU + conv2 projection ----------------
    step_b = (tr * tc * (1 + 4 * 4)                  # adj + live f32 block temps
              + tc * hf1 * 2                         # streamed h1 column block
              + tr * (heads1 * 8 + hf1 * 4)          # m/l/acc scratch
              + tr * (f2p * 2 + 8)                   # h2 / a_src2 / a_dst2 out
              + hf1 * f2p * 2 + f2p * 4 + hf1 * 4)   # resident weights
    cost_b = pl.CostEstimate(
        flops=int(heads1 * npad * npad * (2 * f1 + 10) + npad * 2 * hf1 * f2p),
        transcendentals=int(heads1 * npad * npad),
        bytes_accessed=int(npad * npad + gi * npad * hf1 * 2
                           + npad * (heads1 * 8 + f2p * 2 + 8)))
    h2, a_src2, a_dst2 = pl.pallas_call(
        functools.partial(_gat1_attn_kernel, heads=heads1, f_out=f1,
                          exp_dtype=_EXP_DTYPE),
        grid=(gi, gj),
        in_specs=[pl.BlockSpec((tr, tc), lambda i, j: (i, j)),        # adj int8
                  pl.BlockSpec((tr, heads1), lambda i, j: (i, 0)),    # a_dst1
                  pl.BlockSpec((heads1, tc), lambda i, j: (0, j)),    # a_src1
                  pl.BlockSpec((tc, hf1), lambda i, j: (j, 0)),       # h1 cols
                  pl.BlockSpec((1, hf1), lambda i, j: (0, 0)),        # b1
                  pl.BlockSpec((hf1, f2p), lambda i, j: (0, 0)),      # w2
                  pl.BlockSpec((f2p, 2), lambda i, j: (0, 0))],       # att2
        out_specs=(pl.BlockSpec((tr, f2p), lambda i, j: (i, 0)),      # h2 bf16
                   pl.BlockSpec((1, tr), lambda i, j: (0, i)),        # a_src2
                   pl.BlockSpec((tr, 1), lambda i, j: (i, 0))),       # a_dst2
        out_shape=(jax.ShapeDtypeStruct((npad, f2p), bf16),
                   jax.ShapeDtypeStruct((1, npad), f32),
                   jax.ShapeDtypeStruct((npad, 1), f32)),
        scratch_shapes=[pltpu.VMEM((tr, heads1), f32),
                        pltpu.VMEM((tr, heads1), f32),
                        pltpu.VMEM((tr, hf1), f32)],
        compiler_params=_cparams(("parallel", "arbitrary"), step_b),
        cost_estimate=cost_b,
    )(adj_i8, a_dst1, a_src1, h1, b1, w2_bf, att2_bf)

    # ---- kernel C: conv2 attention + fused fc --------------------------------
    step_c = (tr * tc * (1 + 3 * 4) + tc * f2p * 2 + tr * (8 + 2 * f2p * 4)
              + f2p * f2p * 2 + f2p * 8)
    cost_c = pl.CostEstimate(
        flops=int(npad * npad * (2 * f2p + 10) + npad * 2 * f2p * f2p),
        transcendentals=int(npad * npad),
        bytes_accessed=int(npad * npad + gi * npad * f2p * 2 + npad * f2p * 4))
    out_p = pl.pallas_call(
        functools.partial(_gat2_attn_fc_kernel, exp_dtype=_EXP_DTYPE),
        grid=(gi, gj),
        in_specs=[pl.BlockSpec((tr, tc), lambda i, j: (i, j)),        # adj int8
                  pl.BlockSpec((tr, 1), lambda i, j: (i, 0)),         # a_dst2
                  pl.BlockSpec((1, tc), lambda i, j: (0, j)),         # a_src2
                  pl.BlockSpec((tc, f2p), lambda i, j: (j, 0)),       # h2 cols
                  pl.BlockSpec((1, f2p), lambda i, j: (0, 0)),        # b2
                  pl.BlockSpec((f2p, f2p), lambda i, j: (0, 0)),      # fc_w
                  pl.BlockSpec((1, f2p), lambda i, j: (0, 0))],       # fc_b
        out_specs=pl.BlockSpec((tr, f2p), lambda i, j: (i, 0)),
        out_shape=jax.ShapeDtypeStruct((npad, f2p), f32),
        scratch_shapes=[pltpu.VMEM((tr, 1), f32),
                        pltpu.VMEM((tr, 1), f32),
                        pltpu.VMEM((tr, f2p), f32)],
        compiler_params=_cparams(("parallel", "arbitrary"), step_c),
        cost_estimate=cost_c,
    )(adj_i8, a_dst2, a_src2, h2, b2, fcw_bf, fcb)

    return out_p[:n, :out_dim]


# ----------------------------------------------------------------------------
# Pure-JAX references (dense-adjacency semantics)
# ----------------------------------------------------------------------------
def _gat_ref(x, w, att_src, att_dst, bias, adj, apply_relu):
    n = x.shape[0]
    heads, f_out = att_src.shape
    h = (x @ w).reshape(n, heads, f_out)
    a_s = (h * att_src[None]).sum(-1)
    a_d = (h * att_dst[None]).sum(-1)
    e = a_d[:, None, :] + a_s[None, :, :]
    e = jnp.where(e >= 0, e, 0.2 * e)
    e = jnp.where(adj[:, :, None] > 0, e, NEG_INF)
    alpha = jax.nn.softmax(e, axis=1)
    out = jnp.einsum("ijh,jhf->ihf", alpha, h).reshape(n, heads * f_out) + bias
    if apply_relu:
        out = jnp.maximum(out, 0.0)
    return out


def _model_ref(x, adj, p):
    x = _gat_ref(x, p["w1"], p["att_src1"], p["att_dst1"], p["b1"], adj, True)
    x = _gat_ref(x, p["w2"], p["att_src2"], p["att_dst2"], p["b2"], adj, False)
    return x @ p["fc_w"] + p["fc_b"]


def _rt(a):
    return a.astype(jnp.bfloat16).astype(jnp.float32)


def _gat_ref_bf16(x, w, att_src, att_dst, bias, adj, apply_relu):
    n = x.shape[0]
    heads, f_out = att_src.shape
    h = _rt(x) @ _rt(w)
    hh_bf = _rt(h.reshape(n, heads, f_out))
    a_s = (hh_bf * _rt(att_src)[None]).sum(-1)
    a_d = (hh_bf * _rt(att_dst)[None]).sum(-1)
    e = a_d[:, None, :] + a_s[None, :, :]
    e = jnp.where(e >= 0, e, 0.2 * e)
    e = jnp.where(adj[:, :, None] > 0, e, NEG_INF)
    e = e - e.max(axis=1, keepdims=True)
    p = jnp.exp(e.astype(_EXP_DTYPE)).astype(jnp.float32)
    agg = jnp.einsum("ijh,jhf->ihf", _rt(p), hh_bf)
    out = (agg / p.sum(axis=1)[:, :, None]).reshape(n, heads * f_out) + bias
    if apply_relu:
        out = jnp.maximum(out, 0.0)
    return out


def _model_ref_bf16(x, adj, p):
    x = _gat_ref_bf16(x, p["w1"], p["att_src1"], p["att_dst1"], p["b1"], adj, True)
    x = _gat_ref_bf16(x, p["w2"], p["att_src2"], p["att_dst2"], p["b2"], adj, False)
    return _rt(x) @ _rt(p["fc_w"]) + p["fc_b"]


# ----------------------------------------------------------------------------
# Main
# ----------------------------------------------------------------------------
if __name__ == "__main__":
    N_NODES = 8
    INPUT_DIM = 16
    HIDDEN_DIM = 32
    OUTPUT_DIM = 16
    HEADS = 4

    key = jax.random.PRNGKey(0)
    ks = jax.random.split(key, 12)

    params = {
        "w1": 0.2 * jax.random.normal(ks[0], (INPUT_DIM, HEADS * HIDDEN_DIM), jnp.float32),
        "att_src1": 0.2 * jax.random.normal(ks[1], (HEADS, HIDDEN_DIM), jnp.float32),
        "att_dst1": 0.2 * jax.random.normal(ks[2], (HEADS, HIDDEN_DIM), jnp.float32),
        "b1": 0.1 * jax.random.normal(ks[3], (HEADS * HIDDEN_DIM,), jnp.float32),
        "w2": 0.2 * jax.random.normal(ks[4], (HEADS * HIDDEN_DIM, OUTPUT_DIM), jnp.float32),
        "att_src2": 0.2 * jax.random.normal(ks[5], (1, OUTPUT_DIM), jnp.float32),
        "att_dst2": 0.2 * jax.random.normal(ks[6], (1, OUTPUT_DIM), jnp.float32),
        "b2": 0.1 * jax.random.normal(ks[7], (OUTPUT_DIM,), jnp.float32),
        "fc_w": 0.2 * jax.random.normal(ks[8], (OUTPUT_DIM, OUTPUT_DIM), jnp.float32),
        "fc_b": 0.1 * jax.random.normal(ks[9], (OUTPUT_DIM,), jnp.float32),
    }

    x = jax.random.normal(ks[10], (N_NODES, INPUT_DIM), jnp.float32)

    # Graph: bidirectional ring + a few random edges + self-loops as a dense
    # adjacency mask adj[i, j] = 1 iff edge j -> i.
    adj = jnp.zeros((N_NODES, N_NODES), jnp.float32)
    for i in range(N_NODES):
        adj = adj.at[(i + 1) % N_NODES, i].set(1.0)
        adj = adj.at[i, (i + 1) % N_NODES].set(1.0)
    extra = jax.random.randint(ks[11], (4, 2), 0, N_NODES)
    for s, t in [tuple(map(int, e)) for e in extra]:
        adj = adj.at[t, s].set(1.0)
    adj = adj.at[jnp.arange(N_NODES), jnp.arange(N_NODES)].set(1.0)  # self loops

    out = jax.block_until_ready(gat_model_forward(x, adj, params))

    ref_bf = _model_ref_bf16(x, adj, params)  # mirrors kernel bf16 MXU numerics
    ref_f32 = _model_ref(x, adj, params)      # true f32 semantics (sanity bound)

    assert out.shape == (N_NODES, OUTPUT_DIM), out.shape
    assert jnp.allclose(out, ref_bf, atol=1e-2, rtol=1e-2), (
        float(jnp.max(jnp.abs(out - ref_bf))))
    assert jnp.allclose(out, ref_f32, atol=1e-1, rtol=1e-1), (
        float(jnp.max(jnp.abs(out - ref_f32))))

    print("KERNEL_OK")
</pallas_src>

<mosaic_0001>
module attributes {stable_mosaic.version = 11 : i64} {
  func.func @_gat1_proj_kernel(%arg0: i32, %arg1: memref<8x16xbf16, #tpu.memory_space<vmem>>, %arg2: memref<16x128xbf16, #tpu.memory_space<vmem>>, %arg3: memref<128x8xbf16, #tpu.memory_space<vmem>>, %arg4: memref<8x128xbf16, #tpu.memory_space<vmem>>, %arg5: memref<4x8xf32, #tpu.memory_space<vmem>>, %arg6: memref<8x4xf32, #tpu.memory_space<vmem>>) attributes {dimension_semantics = [#tpu.dimension_semantics<parallel>], iteration_bounds = array<i64: 1>, scalar_prefetch = 0 : i64, scratch_operands = 0 : i64, tpu.core_type = #tpu.core_type<tc>, window_params = [{transform_indices = @transform_0, window_bounds = array<i64: 8, 16>}, {pipeline_mode = #tpu.pipeline_mode<synchronous>, transform_indices = @transform_1, window_bounds = array<i64: 16, 128>}, {pipeline_mode = #tpu.pipeline_mode<synchronous>, transform_indices = @transform_2, window_bounds = array<i64: 128, 8>}, {transform_indices = @transform_3, window_bounds = array<i64: 8, 128>}, {transform_indices = @transform_4, window_bounds = array<i64: 4, 8>}, {transform_indices = @transform_5, window_bounds = array<i64: 8, 4>}]} {
    %c0 = arith.constant 0 : index
    %c0_0 = arith.constant 0 : index
    %0 = vector.load %arg1[%c0, %c0_0] : memref<8x16xbf16, #tpu.memory_space<vmem>>, vector<8x16xbf16>
    %c0_1 = arith.constant 0 : index
    %c0_2 = arith.constant 0 : index
    %1 = vector.load %arg2[%c0_1, %c0_2] : memref<16x128xbf16, #tpu.memory_space<vmem>>, vector<16x128xbf16>
    %cst = arith.constant dense<0.000000e+00> : vector<8x128xf32>
    %2 = tpu.matmul %0, %1, %cst {dimension_numbers = #tpu.dot_dimension_numbers<[1], [0], [0], [1], [0, 0, 1, 1], [], []>} : vector<8x16xbf16>, vector<16x128xbf16>, vector<8x128xf32> -> vector<8x128xf32>
    %3 = arith.truncf %2 : vector<8x128xf32> to vector<8x128xbf16>
    %c0_3 = arith.constant 0 : index
    %c0_4 = arith.constant 0 : index
    %4 = vector.load %arg3[%c0_3, %c0_4] : memref<128x8xbf16, #tpu.memory_space<vmem>>, vector<128x8xbf16>
    %cst_5 = arith.constant dense<0.000000e+00> : vector<8x8xf32>
    %5 = tpu.matmul %3, %4, %cst_5 {dimension_numbers = #tpu.dot_dimension_numbers<[1], [0], [0], [1], [0, 0, 1, 1], [], []>} : vector<8x128xbf16>, vector<128x8xbf16>, vector<8x8xf32> -> vector<8x8xf32>
    %c0_6 = arith.constant 0 : index
    %c0_7 = arith.constant 0 : index
    %6 = vector.load %arg4[%c0_6, %c0_7] : memref<8x128xbf16, #tpu.memory_space<vmem>>, vector<8x128xbf16>
    tpu.vector_store %arg4[%c0_6, %c0_7], %3 {strides = array<i32>} : memref<8x128xbf16, #tpu.memory_space<vmem>>, vector<8x128xbf16>,
    %7 = vector.extract_strided_slice %5 {offsets = [0, 0], sizes = [8, 4], strides = [1, 1]} : vector<8x8xf32> to vector<8x4xf32>
    %8 = tpu.transpose %7, [1, 0] : vector<8x4xf32> -> vector<4x8xf32>
    %c0_8 = arith.constant 0 : index
    %c0_9 = arith.constant 0 : index
    %9 = vector.load %arg5[%c0_8, %c0_9] : memref<4x8xf32, #tpu.memory_space<vmem>>, vector<4x8xf32>
    tpu.vector_store %arg5[%c0_8, %c0_9], %8 {strides = array<i32>} : memref<4x8xf32, #tpu.memory_space<vmem>>, vector<4x8xf32>,
    %10 = vector.extract_strided_slice %5 {offsets = [0, 4], sizes = [8, 4], strides = [1, 1]} : vector<8x8xf32> to vector<8x4xf32>
    %c0_10 = arith.constant 0 : index
    %c0_11 = arith.constant 0 : index
    %11 = vector.load %arg6[%c0_10, %c0_11] : memref<8x4xf32, #tpu.memory_space<vmem>>, vector<8x4xf32>
    tpu.vector_store %arg6[%c0_10, %c0_11], %10 {strides = array<i32>} : memref<8x4xf32, #tpu.memory_space<vmem>>, vector<8x4xf32>,
    return
  }
  func.func @transform_0(%arg0: i32) -> (i32, i32) {
    %c0_i32 = arith.constant 0 : i32
    %c0_i32_0 = arith.constant 0 : i32
    return %arg0, %c0_i32 : i32, i32
  }
  func.func @transform_1(%arg0: i32) -> (i32, i32) {
    %c0_i32 = arith.constant 0 : i32
    %c0_i32_0 = arith.constant 0 : i32
    %c0_i32_1 = arith.constant 0 : i32
    return %c0_i32, %c0_i32_0 : i32, i32
  }
  func.func @transform_2(%arg0: i32) -> (i32, i32) {
    %c0_i32 = arith.constant 0 : i32
    %c0_i32_0 = arith.constant 0 : i32
    %c0_i32_1 = arith.constant 0 : i32
    return %c0_i32, %c0_i32_0 : i32, i32
  }
  func.func @transform_3(%arg0: i32) -> (i32, i32) {
    %c0_i32 = arith.constant 0 : i32
    %c0_i32_0 = arith.constant 0 : i32
    return %arg0, %c0_i32 : i32, i32
  }
  func.func @transform_4(%arg0: i32) -> (i32, i32) {
    %c0_i32 = arith.constant 0 : i32
    %c0_i32_0 = arith.constant 0 : i32
    return %c0_i32, %arg0 : i32, i32
  }
  func.func @transform_5(%arg0: i32) -> (i32, i32) {
    %c0_i32 = arith.constant 0 : i32
    %c0_i32_0 = arith.constant 0 : i32
    return %arg0, %c0_i32 : i32, i32
  }
}

module attributes {stable_mosaic.version = 11 : i64} {
  func.func @_gat2_attn_fc_kernel(%arg0: i32, %arg1: i32, %arg2: memref<8x8xi8, #tpu.memory_space<vmem>>, %arg3: memref<8x1xf32, #tpu.memory_space<vmem>>, %arg4: memref<1x8xf32, #tpu.memory_space<vmem>>, %arg5: memref<8x128xbf16, #tpu.memory_space<vmem>>, %arg6: memref<1x128xf32, #tpu.memory_space<vmem>>, %arg7: memref<128x128xbf16, #tpu.memory_space<vmem>>, %arg8: memref<1x128xf32, #tpu.memory_space<vmem>>, %arg9: memref<8x128xf32, #tpu.memory_space<vmem>>, %arg10: memref<8x1xf32, #tpu.memory_space<vmem>>, %arg11: memref<8x1xf32, #tpu.memory_space<vmem>>, %arg12: memref<8x128xf32, #tpu.memory_space<vmem>>) attributes {dimension_semantics = [#tpu.dimension_semantics<parallel>, #tpu.dimension_semantics<arbitrary>], iteration_bounds = array<i64: 1, 1>, scalar_prefetch = 0 : i64, scratch_operands = 3 : i64, tpu.core_type = #tpu.core_type<tc>, window_params = [{transform_indices = @transform_0, window_bounds = array<i64: 8, 8>}, {transform_indices = @transform_1, window_bounds = array<i64: 8, 1>}, {transform_indices = @transform_2, window_bounds = array<i64: 1, 8>}, {transform_indices = @transform_3, window_bounds = array<i64: 8, 128>}, {pipeline_mode = #tpu.pipeline_mode<synchronous>, transform_indices = @transform_4, window_bounds = array<i64: 1, 128>}, {pipeline_mode = #tpu.pipeline_mode<synchronous>, transform_indices = @transform_5, window_bounds = array<i64: 128, 128>}, {pipeline_mode = #tpu.pipeline_mode<synchronous>, transform_indices = @transform_6, window_bounds = array<i64: 1, 128>}, {transform_indices = @transform_7, window_bounds = array<i64: 8, 128>}]} {
    %c0_i32 = arith.constant 0 : i32
    %0 = arith.cmpi eq, %arg1, %c0_i32 : i32
    %1 = arith.extui %0 : i1 to i32
    %c0_i32_0 = arith.constant 0 : i32
    %2 = arith.cmpi ne, %1, %c0_i32_0 : i32
    scf.if %2 {
      %cst_27 = arith.constant 0xFF800000 : f32
      %45 = vector.broadcast %cst_27 : f32 to vector<8x1xf32>
      %c0_28 = arith.constant 0 : index
      %c0_29 = arith.constant 0 : index
      %46 = vector.load %arg10[%c0_28, %c0_29] : memref<8x1xf32, #tpu.memory_space<vmem>>, vector<8x1xf32>
      tpu.vector_store %arg10[%c0_28, %c0_29], %45 {strides = array<i32>} : memref<8x1xf32, #tpu.memory_space<vmem>>, vector<8x1xf32>,
      %cst_30 = arith.constant 0.000000e+00 : f32
      %47 = vector.broadcast %cst_30 : f32 to vector<8x1xf32>
      %c0_31 = arith.constant 0 : index
      %c0_32 = arith.constant 0 : index
      %48 = vector.load %arg11[%c0_31, %c0_32] : memref<8x1xf32, #tpu.memory_space<vmem>>, vector<8x1xf32>
      tpu.vector_store %arg11[%c0_31, %c0_32], %47 {strides = array<i32>} : memref<8x1xf32, #tpu.memory_space<vmem>>, vector<8x1xf32>,
      %cst_33 = arith.constant 0.000000e+00 : f32
      %49 = vector.broadcast %cst_33 : f32 to vector<8x128xf32>
      %c0_34 = arith.constant 0 : index
      %c0_35 = arith.constant 0 : index
      %50 = vector.load %arg12[%c0_34, %c0_35] : memref<8x128xf32, #tpu.memory_space<vmem>>, vector<8x128xf32>
      tpu.vector_store %arg12[%c0_34, %c0_35], %49 {strides = array<i32>} : memref<8x128xf32, #tpu.memory_space<vmem>>, vector<8x128xf32>,
    } else {
    }
    %c0 = arith.constant 0 : index
    %c0_1 = arith.constant 0 : index
    %3 = vector.load %arg2[%c0, %c0_1] : memref<8x8xi8, #tpu.memory_space<vmem>>, vector<8x8xi8>
    %4 = arith.sitofp %3 : vector<8x8xi8> to vector<8x8xf32>
    %cst = arith.constant 1.000000e+00 : f32
    %5 = vector.broadcast %cst : f32 to vector<8x8xf32>
    %6 = arith.subf %4, %5 : vector<8x8xf32>
    %cst_2 = arith.constant 1.000000e+30 : f32
    %7 = vector.broadcast %cst_2 : f32 to vector<8x8xf32>
    %8 = arith.mulf %6, %7 : vector<8x8xf32>
    %c0_3 = arith.constant 0 : index
    %c0_4 = arith.constant 0 : index
    %9 = vector.load %arg3[%c0_3, %c0_4] : memref<8x1xf32, #tpu.memory_space<vmem>>, vector<8x1xf32>
    %c0_5 = arith.constant 0 : index
    %c0_6 = arith.constant 0 : index
    %10 = vector.load %arg4[%c0_5, %c0_6] : memref<1x8xf32, #tpu.memory_space<vmem>>, vector<1x8xf32>
    %11 = vector.broadcast %9 : vector<8x1xf32> to vector<8x8xf32>
    %12 = vector.broadcast %10 : vector<1x8xf32> to vector<8x8xf32>
    %13 = arith.addf %11, %12 : vector<8x8xf32>
    %cst_7 = arith.constant 2.000000e-01 : f32
    %14 = vector.broadcast %cst_7 : f32 to vector<8x8xf32>
    %15 = arith.mulf %14, %13 : vector<8x8xf32>
    %16 = arith.maximumf %13, %15 : vector<8x8xf32>
    %17 = arith.addf %16, %8 : vector<8x8xf32>
    %c0_8 = arith.constant 0 : index
    %c0_9 = arith.constant 0 : index
    %18 = vector.load %arg10[%c0_8, %c0_9] : memref<8x1xf32, #tpu.memory_space<vmem>>, vector<8x1xf32>
    %cst_10 = arith.constant dense<0xFF800000> : vector<8xf32>
    %19 = vector.multi_reduction <maximumf>, %17, %cst_10 [1] : vector<8x8xf32> to vector<8xf32>
    %20 = vector.shape_cast %19 : vector<8xf32> to vector<8x1xf32>
    %21 = arith.maximumf %18, %20 : vector<8x1xf32>
    %22 = arith.subf %18, %21 : vector<8x1xf32>
    %23 = math.exp %22 : vector<8x1xf32>
    %24 = vector.broadcast %21 : vector<8x1xf32> to vector<8x8xf32>
    %25 = arith.subf %17, %24 : vector<8x8xf32>
    %26 = math.exp %25 : vector<8x8xf32>
    %c0_11 = arith.constant 0 : index
    %c0_12 = arith.constant 0 : index
    %27 = vector.load %arg11[%c0_11, %c0_12] : memref<8x1xf32, #tpu.memory_space<vmem>>, vector<8x1xf32>
    %28 = arith.mulf %23, %27 : vector<8x1xf32>
    %cst_13 = arith.constant dense<0.000000e+00> : vector<8xf32>
    %29 = vector.multi_reduction <add>, %26, %cst_13 [1] : vector<8x8xf32> to vector<8xf32>
    %30 = vector.shape_cast %29 : vector<8xf32> to vector<8x1xf32>
    %31 = arith.addf %28, %30 : vector<8x1xf32>
    %c0_14 = arith.constant 0 : index
    %c0_15 = arith.constant 0 : index
    %32 = vector.load %arg11[%c0_14, %c0_15] : memref<8x1xf32, #tpu.memory_space<vmem>>, vector<8x1xf32>
    tpu.vector_store %arg11[%c0_14, %c0_15], %31 {strides = array<i32>} : memref<8x1xf32, #tpu.memory_space<vmem>>, vector<8x1xf32>,
    %c0_16 = arith.constant 0 : index
    %c0_17 = arith.constant 0 : index
    %33 = vector.load %arg12[%c0_16, %c0_17] : memref<8x128xf32, #tpu.memory_space<vmem>>, vector<8x128xf32>
    %34 = vector.broadcast %23 : vector<8x1xf32> to vector<8x128xf32>
    %35 = arith.mulf %34, %33 : vector<8x128xf32>
    %36 = arith.truncf %26 : vector<8x8xf32> to vector<8x8xbf16>
    %c0_18 = arith.constant 0 : index
    %c0_19 = arith.constant 0 : index
    %37 = vector.load %arg5[%c0_18, %c0_19] : memref<8x128xbf16, #tpu.memory_space<vmem>>, vector<8x128xbf16>
    %cst_20 = arith.constant dense<0.000000e+00> : vector<8x128xf32>
    %38 = tpu.matmul %36, %37, %cst_20 {dimension_numbers = #tpu.dot_dimension_numbers<[1], [0], [0], [1], [0, 0, 1, 1], [], []>} : vector<8x8xbf16>, vector<8x128xbf16>, vector<8x128xf32> -> vector<8x128xf32>
    %39 = arith.addf %35, %38 : vector<8x128xf32>
    %c0_21 = arith.constant 0 : index
    %c0_22 = arith.constant 0 : index
    %40 = vector.load %arg12[%c0_21, %c0_22] : memref<8x128xf32, #tpu.memory_space<vmem>>, vector<8x128xf32>
    tpu.vector_store %arg12[%c0_21, %c0_22], %39 {strides = array<i32>} : memref<8x128xf32, #tpu.memory_space<vmem>>, vector<8x128xf32>,
    %c0_23 = arith.constant 0 : index
    %c0_24 = arith.constant 0 : index
    %41 = vector.load %arg10[%c0_23, %c0_24] : memref<8x1xf32, #tpu.memory_space<vmem>>, vector<8x1xf32>
    tpu.vector_store %arg10[%c0_23, %c0_24], %21 {strides = array<i32>} : memref<8x1xf32, #tpu.memory_space<vmem>>, vector<8x1xf32>,
    %c0_i32_25 = arith.constant 0 : i32
    %42 = arith.cmpi eq, %arg1, %c0_i32_25 : i32
    %43 = arith.extui %42 : i1 to i32
    %c0_i32_26 = arith.constant 0 : i32
    %44 = arith.cmpi ne, %43, %c0_i32_26 : i32
    scf.if %44 {
      %c0_27 = arith.constant 0 : index
      %c0_28 = arith.constant 0 : index
      %45 = vector.load %arg11[%c0_27, %c0_28] : memref<8x1xf32, #tpu.memory_space<vmem>>, vector<8x1xf32>
      %46 = tpu.reciprocal %45 {approx = true} : vector<8x1xf32> -> vector<8x1xf32>
      %c0_29 = arith.constant 0 : index
      %c0_30 = arith.constant 0 : index
      %47 = vector.load %arg12[%c0_29, %c0_30] : memref<8x128xf32, #tpu.memory_space<vmem>>, vector<8x128xf32>
      %48 = vector.broadcast %46 : vector<8x1xf32> to vector<8x128xf32>
      %49 = arith.mulf %47, %48 : vector<8x128xf32>
      %c0_31 = arith.constant 0 : index
      %c0_32 = arith.constant 0 : index
      %50 = vector.load %arg6[%c0_31, %c0_32] : memref<1x128xf32, #tpu.memory_space<vmem>>, vector<1x128xf32>
      %51 = vector.broadcast %50 : vector<1x128xf32> to vector<8x128xf32>
      %52 = arith.addf %49, %51 : vector<8x128xf32>
      %53 = arith.truncf %52 : vector<8x128xf32> to vector<8x128xbf16>
      %c0_33 = arith.constant 0 : index
      %c0_34 = arith.constant 0 : index
      %54 = vector.load %arg7[%c0_33, %c0_34] : memref<128x128xbf16, #tpu.memory_space<vmem>>, vector<128x128xbf16>
      %cst_35 = arith.constant dense<0.000000e+00> : vector<8x128xf32>
      %55 = tpu.matmul %53, %54, %cst_35 {dimension_numbers = #tpu.dot_dimension_numbers<[1], [0], [0], [1], [0, 0, 1, 1], [], []>} : vector<8x128xbf16>, vector<128x128xbf16>, vector<8x128xf32> -> vector<8x128xf32>
      %c0_36 = arith.constant 0 : index
      %c0_37 = arith.constant 0 : index
      %56 = vector.load %arg8[%c0_36, %c0_37] : memref<1x128xf32, #tpu.memory_space<vmem>>, vector<1x128xf32>
      %57 = vector.broadcast %56 : vector<1x128xf32> to vector<8x128xf32>
      %58 = arith.addf %55, %57 : vector<8x128xf32>
      %c0_38 = arith.constant 0 : index
      %c0_39 = arith.constant 0 : index
      %59 = vector.load %arg9[%c0_38, %c0_39] : memref<8x128xf32, #tpu.memory_space<vmem>>, vector<8x128xf32>
      tpu.vector_store %arg9[%c0_38, %c0_39], %58 {strides = array<i32>} : memref<8x128xf32, #tpu.memory_space<vmem>>, vector<8x128xf32>,
    } else {
    }
    return
  }
  func.func @transform_0(%arg0: i32, %arg1: i32) -> (i32, i32) {
    %c0_i32 = arith.constant 0 : i32
    return %arg0, %arg1 : i32, i32
  }
  func.func @transform_1(%arg0: i32, %arg1: i32) -> (i32, i32) {
    %c0_i32 = arith.constant 0 : i32
    %c0_i32_0 = arith.constant 0 : i32
    return %arg0, %c0_i32 : i32, i32
  }
  func.func @transform_2(%arg0: i32, %arg1: i32) -> (i32, i32) {
    %c0_i32 = arith.constant 0 : i32
    %c0_i32_0 = arith.constant 0 : i32
    return %c0_i32, %arg1 : i32, i32
  }
  func.func @transform_3(%arg0: i32, %arg1: i32) -> (i32, i32) {
    %c0_i32 = arith.constant 0 : i32
    %c0_i32_0 = arith.constant 0 : i32
    return %arg1, %c0_i32 : i32, i32
  }
  func.func @transform_4(%arg0: i32, %arg1: i32) -> (i32, i32) {
    %c0_i32 = arith.constant 0 : i32
    %c0_i32_0 = arith.constant 0 : i32
    %c0_i32_1 = arith.constant 0 : i32
    return %c0_i32, %c0_i32_0 : i32, i32
  }
  func.func @transform_5(%arg0: i32, %arg1: i32) -> (i32, i32) {
    %c0_i32 = arith.constant 0 : i32
    %c0_i32_0 = arith.constant 0 : i32
    %c0_i32_1 = arith.constant 0 : i32
    return %c0_i32, %c0_i32_0 : i32, i32
  }
  func.func @transform_6(%arg0: i32, %arg1: i32) -> (i32, i32) {
    %c0_i32 = arith.constant 0 : i32
    %c0_i32_0 = arith.constant 0 : i32
    %c0_i32_1 = arith.constant 0 : i32
    return %c0_i32, %c0_i32_0 : i32, i32
  }
  func.func @transform_7(%arg0: i32, %arg1: i32) -> (i32, i32) {
    %c0_i32 = arith.constant 0 : i32
    %c0_i32_0 = arith.constant 0 : i32
    return %arg0, %c0_i32 : i32, i32
  }
}

module attributes {stable_mosaic.version = 11 : i64} {
  func.func @_gat1_attn_kernel(%arg0: i32, %arg1: i32, %arg2: memref<8x8xi8, #tpu.memory_space<vmem>>, %arg3: memref<8x4xf32, #tpu.memory_space<vmem>>, %arg4: memref<4x8xf32, #tpu.memory_space<vmem>>, %arg5: memref<8x128xbf16, #tpu.memory_space<vmem>>, %arg6: memref<1x128xf32, #tpu.memory_space<vmem>>, %arg7: memref<128x128xbf16, #tpu.memory_space<vmem>>, %arg8: memref<128x2xbf16, #tpu.memory_space<vmem>>, %arg9: memref<8x128xbf16, #tpu.memory_space<vmem>>, %arg10: memref<1x8xf32, #tpu.memory_space<vmem>>, %arg11: memref<8x1xf32, #tpu.memory_space<vmem>>, %arg12: memref<8x4xf32, #tpu.memory_space<vmem>>, %arg13: memref<8x4xf32, #tpu.memory_space<vmem>>, %arg14: memref<8x128xf32, #tpu.memory_space<vmem>>) attributes {dimension_semantics = [#tpu.dimension_semantics<parallel>, #tpu.dimension_semantics<arbitrary>], iteration_bounds = array<i64: 1, 1>, scalar_prefetch = 0 : i64, scratch_operands = 3 : i64, tpu.core_type = #tpu.core_type<tc>, window_params = [{transform_indices = @transform_0, window_bounds = array<i64: 8, 8>}, {transform_indices = @transform_1, window_bounds = array<i64: 8, 4>}, {transform_indices = @transform_2, window_bounds = array<i64: 4, 8>}, {transform_indices = @transform_3, window_bounds = array<i64: 8, 128>}, {pipeline_mode = #tpu.pipeline_mode<synchronous>, transform_indices = @transform_4, window_bounds = array<i64: 1, 128>}, {pipeline_mode = #tpu.pipeline_mode<synchronous>, transform_indices = @transform_5, window_bounds = array<i64: 128, 128>}, {pipeline_mode = #tpu.pipeline_mode<synchronous>, transform_indices = @transform_6, window_bounds = array<i64: 128, 2>}, {transform_indices = @transform_7, window_bounds = array<i64: 8, 128>}, {transform_indices = @transform_8, window_bounds = array<i64: 1, 8>}, {transform_indices = @transform_9, window_bounds = array<i64: 8, 1>}]} {
    %c0_i32 = arith.constant 0 : i32
    %0 = arith.cmpi eq, %arg1, %c0_i32 : i32
    %1 = arith.extui %0 : i1 to i32
    %c0_i32_0 = arith.constant 0 : i32
    %2 = arith.cmpi ne, %1, %c0_i32_0 : i32
    scf.if %2 {
      %cst_69 = arith.constant 0xFF800000 : f32
      %147 = vector.broadcast %cst_69 : f32 to vector<8x4xf32>
      %c0_70 = arith.constant 0 : index
      %c0_71 = arith.constant 0 : index
      %148 = vector.load %arg12[%c0_70, %c0_71] : memref<8x4xf32, #tpu.memory_space<vmem>>, vector<8x4xf32>
      tpu.vector_store %arg12[%c0_70, %c0_71], %147 {strides = array<i32>} : memref<8x4xf32, #tpu.memory_space<vmem>>, vector<8x4xf32>,
      %cst_72 = arith.constant 0.000000e+00 : f32
      %149 = vector.broadcast %cst_72 : f32 to vector<8x4xf32>
      %c0_73 = arith.constant 0 : index
      %c0_74 = arith.constant 0 : index
      %150 = vector.load %arg13[%c0_73, %c0_74] : memref<8x4xf32, #tpu.memory_space<vmem>>, vector<8x4xf32>
      tpu.vector_store %arg13[%c0_73, %c0_74], %149 {strides = array<i32>} : memref<8x4xf32, #tpu.memory_space<vmem>>, vector<8x4xf32>,
      %cst_75 = arith.constant 0.000000e+00 : f32
      %151 = vector.broadcast %cst_75 : f32 to vector<8x128xf32>
      %c0_76 = arith.constant 0 : index
      %c0_77 = arith.constant 0 : index
      %152 = vector.load %arg14[%c0_76, %c0_77] : memref<8x128xf32, #tpu.memory_space<vmem>>, vector<8x128xf32>
      tpu.vector_store %arg14[%c0_76, %c0_77], %151 {strides = array<i32>} : memref<8x128xf32, #tpu.memory_space<vmem>>, vector<8x128xf32>,
    } else {
    }
    %c0 = arith.constant 0 : index
    %c0_1 = arith.constant 0 : index
    %3 = vector.load %arg2[%c0, %c0_1] : memref<8x8xi8, #tpu.memory_space<vmem>>, vector<8x8xi8>
    %4 = arith.sitofp %3 : vector<8x8xi8> to vector<8x8xf32>
    %cst = arith.constant 1.000000e+00 : f32
    %5 = vector.broadcast %cst : f32 to vector<8x8xf32>
    %6 = arith.subf %4, %5 : vector<8x8xf32>
    %cst_2 = arith.constant 1.000000e+30 : f32
    %7 = vector.broadcast %cst_2 : f32 to vector<8x8xf32>
    %8 = arith.mulf %6, %7 : vector<8x8xf32>
    %c0_3 = arith.constant 0 : index
    %c0_4 = arith.constant 0 : index
    %9 = vector.load %arg3[%c0_3, %c0_4] : memref<8x4xf32, #tpu.memory_space<vmem>>, vector<8x4xf32>
    %c0_5 = arith.constant 0 : index
    %c0_6 = arith.constant 0 : index
    %10 = vector.load %arg4[%c0_5, %c0_6] : memref<4x8xf32, #tpu.memory_space<vmem>>, vector<4x8xf32>
    %c0_7 = arith.constant 0 : index
    %c0_8 = arith.constant 0 : index
    %11 = vector.load %arg5[%c0_7, %c0_8] : memref<8x128xbf16, #tpu.memory_space<vmem>>, vector<8x128xbf16>
    %12 = vector.extract_strided_slice %9 {offsets = [0, 0], sizes = [8, 1], strides = [1, 1]} : vector<8x4xf32> to vector<8x1xf32>
    %13 = vector.extract_strided_slice %10 {offsets = [0, 0], sizes = [1, 8], strides = [1, 1]} : vector<4x8xf32> to vector<1x8xf32>
    %14 = vector.broadcast %12 : vector<8x1xf32> to vector<8x8xf32>
    %15 = vector.broadcast %13 : vector<1x8xf32> to vector<8x8xf32>
    %16 = arith.addf %14, %15 : vector<8x8xf32>
    %cst_9 = arith.constant 2.000000e-01 : f32
    %17 = vector.broadcast %cst_9 : f32 to vector<8x8xf32>
    %18 = arith.mulf %17, %16 : vector<8x8xf32>
    %19 = arith.maximumf %16, %18 : vector<8x8xf32>
    %20 = arith.addf %19, %8 : vector<8x8xf32>
    %c0_10 = arith.constant 0 : index
    %c0_11 = arith.constant 0 : index
    %21 = vector.load %arg12[%c0_10, %c0_11] : memref<8x4xf32, #tpu.memory_space<vmem>>, vector<8x1xf32>
    %cst_12 = arith.constant dense<0xFF800000> : vector<8xf32>
    %22 = vector.multi_reduction <maximumf>, %20, %cst_12 [1] : vector<8x8xf32> to vector<8xf32>
    %23 = vector.shape_cast %22 : vector<8xf32> to vector<8x1xf32>
    %24 = arith.maximumf %21, %23 : vector<8x1xf32>
    %25 = arith.subf %21, %24 : vector<8x1xf32>
    %26 = math.exp %25 : vector<8x1xf32>
    %27 = vector.broadcast %24 : vector<8x1xf32> to vector<8x8xf32>
    %28 = arith.subf %20, %27 : vector<8x8xf32>
    %29 = math.exp %28 : vector<8x8xf32>
    %c0_13 = arith.constant 0 : index
    %c0_14 = arith.constant 0 : index
    %30 = vector.load %arg13[%c0_13, %c0_14] : memref<8x4xf32, #tpu.memory_space<vmem>>, vector<8x1xf32>
    %31 = arith.mulf %26, %30 : vector<8x1xf32>
    %cst_15 = arith.constant dense<0.000000e+00> : vector<8xf32>
    %32 = vector.multi_reduction <add>, %29, %cst_15 [1] : vector<8x8xf32> to vector<8xf32>
    %33 = vector.shape_cast %32 : vector<8xf32> to vector<8x1xf32>
    %34 = arith.addf %31, %33 : vector<8x1xf32>
    %c0_16 = arith.constant 0 : index
    %c0_17 = arith.constant 0 : index
    %35 = vector.load %arg13[%c0_16, %c0_17] : memref<8x4xf32, #tpu.memory_space<vmem>>, vector<8x1xf32>
    tpu.vector_store %arg13[%c0_16, %c0_17], %34 {strides = array<i32>} : memref<8x4xf32, #tpu.memory_space<vmem>>, vector<8x1xf32>,
    %c0_18 = arith.constant 0 : index
    %c0_19 = arith.constant 0 : index
    %36 = vector.load %arg14[%c0_18, %c0_19] : memref<8x128xf32, #tpu.memory_space<vmem>>, vector<8x32xf32>
    %37 = vector.broadcast %26 : vector<8x1xf32> to vector<8x32xf32>
    %38 = arith.mulf %37, %36 : vector<8x32xf32>
    %39 = arith.truncf %29 : vector<8x8xf32> to vector<8x8xbf16>
    %40 = vector.extract_strided_slice %11 {offsets = [0, 0], sizes = [8, 32], strides = [1, 1]} : vector<8x128xbf16> to vector<8x32xbf16>
    %cst_20 = arith.constant dense<0.000000e+00> : vector<8x32xf32>
    %41 = tpu.matmul %39, %40, %cst_20 {dimension_numbers = #tpu.dot_dimension_numbers<[1], [0], [0], [1], [0, 0, 1, 1], [], []>} : vector<8x8xbf16>, vector<8x32xbf16>, vector<8x32xf32> -> vector<8x32xf32>
    %42 = arith.addf %38, %41 : vector<8x32xf32>
    %c0_21 = arith.constant 0 : index
    %c0_22 = arith.constant 0 : index
    %43 = vector.load %arg14[%c0_21, %c0_22] : memref<8x128xf32, #tpu.memory_space<vmem>>, vector<8x32xf32>
    tpu.vector_store %arg14[%c0_21, %c0_22], %42 {strides = array<i32>} : memref<8x128xf32, #tpu.memory_space<vmem>>, vector<8x32xf32>,
    %c0_23 = arith.constant 0 : index
    %c0_24 = arith.constant 0 : index
    %44 = vector.load %arg12[%c0_23, %c0_24] : memref<8x4xf32, #tpu.memory_space<vmem>>, vector<8x1xf32>
    tpu.vector_store %arg12[%c0_23, %c0_24], %24 {strides = array<i32>} : memref<8x4xf32, #tpu.memory_space<vmem>>, vector<8x1xf32>,
    %45 = vector.extract_strided_slice %9 {offsets = [0, 1], sizes = [8, 1], strides = [1, 1]} : vector<8x4xf32> to vector<8x1xf32>
    %46 = vector.extract_strided_slice %10 {offsets = [1, 0], sizes = [1, 8], strides = [1, 1]} : vector<4x8xf32> to vector<1x8xf32>
    %47 = vector.broadcast %45 : vector<8x1xf32> to vector<8x8xf32>
    %48 = vector.broadcast %46 : vector<1x8xf32> to vector<8x8xf32>
    %49 = arith.addf %47, %48 : vector<8x8xf32>
    %cst_25 = arith.constant 2.000000e-01 : f32
    %50 = vector.broadcast %cst_25 : f32 to vector<8x8xf32>
    %51 = arith.mulf %50, %49 : vector<8x8xf32>
    %52 = arith.maximumf %49, %51 : vector<8x8xf32>
    %53 = arith.addf %52, %8 : vector<8x8xf32>
    %c0_26 = arith.constant 0 : index
    %c1 = arith.constant 1 : index
    %54 = vector.load %arg12[%c0_26, %c1] : memref<8x4xf32, #tpu.memory_space<vmem>>, vector<8x1xf32>
    %cst_27 = arith.constant dense<0xFF800000> : vector<8xf32>
    %55 = vector.multi_reduction <maximumf>, %53, %cst_27 [1] : vector<8x8xf32> to vector<8xf32>
    %56 = vector.shape_cast %55 : vector<8xf32> to vector<8x1xf32>
    %57 = arith.maximumf %54, %56 : vector<8x1xf32>
    %58 = arith.subf %54, %57 : vector<8x1xf32>
    %59 = math.exp %58 : vector<8x1xf32>
    %60 = vector.broadcast %57 : vector<8x1xf32> to vector<8x8xf32>
    %61 = arith.subf %53, %60 : vector<8x8xf32>
    %62 = math.exp %61 : vector<8x8xf32>
    %c0_28 = arith.constant 0 : index
    %c1_29 = arith.constant 1 : index
    %63 = vector.load %arg13[%c0_28, %c1_29] : memref<8x4xf32, #tpu.memory_space<vmem>>, vector<8x1xf32>
    %64 = arith.mulf %59, %63 : vector<8x1xf32>
    %cst_30 = arith.constant dense<0.000000e+00> : vector<8xf32>
    %65 = vector.multi_reduction <add>, %62, %cst_30 [1] : vector<8x8xf32> to vector<8xf32>
    %66 = vector.shape_cast %65 : vector<8xf32> to vector<8x1xf32>
    %67 = arith.addf %64, %66 : vector<8x1xf32>
    %c0_31 = arith.constant 0 : index
    %c1_32 = arith.constant 1 : index
    %68 = vector.load %arg13[%c0_31, %c1_32] : memref<8x4xf32, #tpu.memory_space<vmem>>, vector<8x1xf32>
    tpu.vector_store %arg13[%c0_31, %c1_32], %67 {strides = array<i32>} : memref<8x4xf32, #tpu.memory_space<vmem>>, vector<8x1xf32>,
    %c0_33 = arith.constant 0 : index
    %c32 = arith.constant 32 : index
    %69 = vector.load %arg14[%c0_33, %c32] : memref<8x128xf32, #tpu.memory_space<vmem>>, vector<8x32xf32>
    %70 = vector.broadcast %59 : vector<8x1xf32> to vector<8x32xf32>
    %71 = arith.mulf %70, %69 : vector<8x32xf32>
    %72 = arith.truncf %62 : vector<8x8xf32> to vector<8x8xbf16>
    %73 = vector.extract_strided_slice %11 {offsets = [0, 32], sizes = [8, 32], strides = [1, 1]} : vector<8x128xbf16> to vector<8x32xbf16>
    %cst_34 = arith.constant dense<0.000000e+00> : vector<8x32xf32>
    %74 = tpu.matmul %72, %73, %cst_34 {dimension_numbers = #tpu.dot_dimension_numbers<[1], [0], [0], [1], [0, 0, 1, 1], [], []>} : vector<8x8xbf16>, vector<8x32xbf16>, vector<8x32xf32> -> vector<8x32xf32>
    %75 = arith.addf %71, %74 : vector<8x32xf32>
    %c0_35 = arith.constant 0 : index
    %c32_36 = arith.constant 32 : index
    %76 = vector.load %arg14[%c0_35, %c32_36] : memref<8x128xf32, #tpu.memory_space<vmem>>, vector<8x32xf32>
    tpu.vector_store %arg14[%c0_35, %c32_36], %75 {strides = array<i32>} : memref<8x128xf32, #tpu.memory_space<vmem>>, vector<8x32xf32>,
    %c0_37 = arith.constant 0 : index
    %c1_38 = arith.constant 1 : index
    %77 = vector.load %arg12[%c0_37, %c1_38] : memref<8x4xf32, #tpu.memory_space<vmem>>, vector<8x1xf32>
    tpu.vector_store %arg12[%c0_37, %c1_38], %57 {strides = array<i32>} : memref<8x4xf32, #tpu.memory_space<vmem>>, vector<8x1xf32>,
    %78 = vector.extract_strided_slice %9 {offsets = [0, 2], sizes = [8, 1], strides = [1, 1]} : vector<8x4xf32> to vector<8x1xf32>
    %79 = vector.extract_strided_slice %10 {offsets = [2, 0], sizes = [1, 8], strides = [1, 1]} : vector<4x8xf32> to vector<1x8xf32>
    %80 = vector.broadcast %78 : vector<8x1xf32> to vector<8x8xf32>
    %81 = vector.broadcast %79 : vector<1x8xf32> to vector<8x8xf32>
    %82 = arith.addf %80, %81 : vector<8x8xf32>
    %cst_39 = arith.constant 2.000000e-01 : f32
    %83 = vector.broadcast %cst_39 : f32 to vector<8x8xf32>
    %84 = arith.mulf %83, %82 : vector<8x8xf32>
    %85 = arith.maximumf %82, %84 : vector<8x8xf32>
    %86 = arith.addf %85, %8 : vector<8x8xf32>
    %c0_40 = arith.constant 0 : index
    %c2 = arith.constant 2 : index
    %87 = vector.load %arg12[%c0_40, %c2] : memref<8x4xf32, #tpu.memory_space<vmem>>, vector<8x1xf32>
    %cst_41 = arith.constant dense<0xFF800000> : vector<8xf32>
    %88 = vector.multi_reduction <maximumf>, %86, %cst_41 [1] : vector<8x8xf32> to vector<8xf32>
    %89 = vector.shape_cast %88 : vector<8xf32> to vector<8x1xf32>
    %90 = arith.maximumf %87, %89 : vector<8x1xf32>
    %91 = arith.subf %87, %90 : vector<8x1xf32>
    %92 = math.exp %91 : vector<8x1xf32>
    %93 = vector.broadcast %90 : vector<8x1xf32> to vector<8x8xf32>
    %94 = arith.subf %86, %93 : vector<8x8xf32>
    %95 = math.exp %94 : vector<8x8xf32>
    %c0_42 = arith.constant 0 : index
    %c2_43 = arith.constant 2 : index
    %96 = vector.load %arg13[%c0_42, %c2_43] : memref<8x4xf32, #tpu.memory_space<vmem>>, vector<8x1xf32>
    %97 = arith.mulf %92, %96 : vector<8x1xf32>
    %cst_44 = arith.constant dense<0.000000e+00> : vector<8xf32>
    %98 = vector.multi_reduction <add>, %95, %cst_44 [1] : vector<8x8xf32> to vector<8xf32>
    %99 = vector.shape_cast %98 : vector<8xf32> to vector<8x1xf32>
    %100 = arith.addf %97, %99 : vector<8x1xf32>
    %c0_45 = arith.constant 0 : index
    %c2_46 = arith.constant 2 : index
    %101 = vector.load %arg13[%c0_45, %c2_46] : memref<8x4xf32, #tpu.memory_space<vmem>>, vector<8x1xf32>
    tpu.vector_store %arg13[%c0_45, %c2_46], %100 {strides = array<i32>} : memref<8x4xf32, #tpu.memory_space<vmem>>, vector<8x1xf32>,
    %c0_47 = arith.constant 0 : index
    %c64 = arith.constant 64 : index
    %102 = vector.load %arg14[%c0_47, %c64] : memref<8x128xf32, #tpu.memory_space<vmem>>, vector<8x32xf32>
    %103 = vector.broadcast %92 : vector<8x1xf32> to vector<8x32xf32>
    %104 = arith.mulf %103, %102 : vector<8x32xf32>
    %105 = arith.truncf %95 : vector<8x8xf32> to vector<8x8xbf16>
    %106 = vector.extract_strided_slice %11 {offsets = [0, 64], sizes = [8, 32], strides = [1, 1]} : vector<8x128xbf16> to vector<8x32xbf16>
    %cst_48 = arith.constant dense<0.000000e+00> : vector<8x32xf32>
    %107 = tpu.matmul %105, %106, %cst_48 {dimension_numbers = #tpu.dot_dimension_numbers<[1], [0], [0], [1], [0, 0, 1, 1], [], []>} : vector<8x8xbf16>, vector<8x32xbf16>, vector<8x32xf32> -> vector<8x32xf32>
    %108 = arith.addf %104, %107 : vector<8x32xf32>
    %c0_49 = arith.constant 0 : index
    %c64_50 = arith.constant 64 : index
    %109 = vector.load %arg14[%c0_49, %c64_50] : memref<8x128xf32, #tpu.memory_space<vmem>>, vector<8x32xf32>
    tpu.vector_store %arg14[%c0_49, %c64_50], %108 {strides = array<i32>} : memref<8x128xf32, #tpu.memory_space<vmem>>, vector<8x32xf32>,
    %c0_51 = arith.constant 0 : index
    %c2_52 = arith.constant 2 : index
    %110 = vector.load %arg12[%c0_51, %c2_52] : memref<8x4xf32, #tpu.memory_space<vmem>>, vector<8x1xf32>
    tpu.vector_store %arg12[%c0_51, %c2_52], %90 {strides = array<i32>} : memref<8x4xf32, #tpu.memory_space<vmem>>, vector<8x1xf32>,
    %111 = vector.extract_strided_slice %9 {offsets = [0, 3], sizes = [8, 1], strides = [1, 1]} : vector<8x4xf32> to vector<8x1xf32>
    %112 = vector.extract_strided_slice %10 {offsets = [3, 0], sizes = [1, 8], strides = [1, 1]} : vector<4x8xf32> to vector<1x8xf32>
    %113 = vector.broadcast %111 : vector<8x1xf32> to vector<8x8xf32>
    %114 = vector.broadcast %112 : vector<1x8xf32> to vector<8x8xf32>
    %115 = arith.addf %113, %114 : vector<8x8xf32>
    %cst_53 = arith.constant 2.000000e-01 : f32
    %116 = vector.broadcast %cst_53 : f32 to vector<8x8xf32>
    %117 = arith.mulf %116, %115 : vector<8x8xf32>
    %118 = arith.maximumf %115, %117 : vector<8x8xf32>
    %119 = arith.addf %118, %8 : vector<8x8xf32>
    %c0_54 = arith.constant 0 : index
    %c3 = arith.constant 3 : index
    %120 = vector.load %arg12[%c0_54, %c3] : memref<8x4xf32, #tpu.memory_space<vmem>>, vector<8x1xf32>
    %cst_55 = arith.constant dense<0xFF800000> : vector<8xf32>
    %121 = vector.multi_reduction <maximumf>, %119, %cst_55 [1] : vector<8x8xf32> to vector<8xf32>
    %122 = vector.shape_cast %121 : vector<8xf32> to vector<8x1xf32>
    %123 = arith.maximumf %120, %122 : vector<8x1xf32>
    %124 = arith.subf %120, %123 : vector<8x1xf32>
    %125 = math.exp %124 : vector<8x1xf32>
    %126 = vector.broadcast %123 : vector<8x1xf32> to vector<8x8xf32>
    %127 = arith.subf %119, %126 : vector<8x8xf32>
    %128 = math.exp %127 : vector<8x8xf32>
    %c0_56 = arith.constant 0 : index
    %c3_57 = arith.constant 3 : index
    %129 = vector.load %arg13[%c0_56, %c3_57] : memref<8x4xf32, #tpu.memory_space<vmem>>, vector<8x1xf32>
    %130 = arith.mulf %125, %129 : vector<8x1xf32>
    %cst_58 = arith.constant dense<0.000000e+00> : vector<8xf32>
    %131 = vector.multi_reduction <add>, %128, %cst_58 [1] : vector<8x8xf32> to vector<8xf32>
    %132 = vector.shape_cast %131 : vector<8xf32> to vector<8x1xf32>
    %133 = arith.addf %130, %132 : vector<8x1xf32>
    %c0_59 = arith.constant 0 : index
    %c3_60 = arith.constant 3 : index
    %134 = vector.load %arg13[%c0_59, %c3_60] : memref<8x4xf32, #tpu.memory_space<vmem>>, vector<8x1xf32>
    tpu.vector_store %arg13[%c0_59, %c3_60], %133 {strides = array<i32>} : memref<8x4xf32, #tpu.memory_space<vmem>>, vector<8x1xf32>,
    %c0_61 = arith.constant 0 : index
    %c96 = arith.constant 96 : index
    %135 = vector.load %arg14[%c0_61, %c96] : memref<8x128xf32, #tpu.memory_space<vmem>>, vector<8x32xf32>
    %136 = vector.broadcast %125 : vector<8x1xf32> to vector<8x32xf32>
    %137 = arith.mulf %136, %135 : vector<8x32xf32>
    %138 = arith.truncf %128 : vector<8x8xf32> to vector<8x8xbf16>
    %139 = vector.extract_strided_slice %11 {offsets = [0, 96], sizes = [8, 32], strides = [1, 1]} : vector<8x128xbf16> to vector<8x32xbf16>
    %cst_62 = arith.constant dense<0.000000e+00> : vector<8x32xf32>
    %140 = tpu.matmul %138, %139, %cst_62 {dimension_numbers = #tpu.dot_dimension_numbers<[1], [0], [0], [1], [0, 0, 1, 1], [], []>} : vector<8x8xbf16>, vector<8x32xbf16>, vector<8x32xf32> -> vector<8x32xf32>
    %141 = arith.addf %137, %140 : vector<8x32xf32>
    %c0_63 = arith.constant 0 : index
    %c96_64 = arith.constant 96 : index
    %142 = vector.load %arg14[%c0_63, %c96_64] : memref<8x128xf32, #tpu.memory_space<vmem>>, vector<8x32xf32>
    tpu.vector_store %arg14[%c0_63, %c96_64], %141 {strides = array<i32>} : memref<8x128xf32, #tpu.memory_space<vmem>>, vector<8x32xf32>,
    %c0_65 = arith.constant 0 : index
    %c3_66 = arith.constant 3 : index
    %143 = vector.load %arg12[%c0_65, %c3_66] : memref<8x4xf32, #tpu.memory_space<vmem>>, vector<8x1xf32>
    tpu.vector_store %arg12[%c0_65, %c3_66], %123 {strides = array<i32>} : memref<8x4xf32, #tpu.memory_space<vmem>>, vector<8x1xf32>,
    %c0_i32_67 = arith.constant 0 : i32
    %144 = arith.cmpi eq, %arg1, %c0_i32_67 : i32
    %145 = arith.extui %144 : i1 to i32
    %c0_i32_68 = arith.constant 0 : i32
    %146 = arith.cmpi ne, %145, %c0_i32_68 : i32
    scf.if %146 {
      %c0_69 = arith.constant 0 : index
      %c0_70 = arith.constant 0 : index
      %147 = vector.load %arg13[%c0_69, %c0_70] : memref<8x4xf32, #tpu.memory_space<vmem>>, vector<8x4xf32>
      %148 = tpu.reciprocal %147 {approx = true} : vector<8x4xf32> -> vector<8x4xf32>
      %c0_71 = arith.constant 0 : index
      %c0_72 = arith.constant 0 : index
      %149 = vector.load %arg6[%c0_71, %c0_72] : memref<1x128xf32, #tpu.memory_space<vmem>>, vector<1x128xf32>
      %c0_73 = arith.constant 0 : index
      %c0_74 = arith.constant 0 : index
      %150 = vector.load %arg14[%c0_73, %c0_74] : memref<8x128xf32, #tpu.memory_space<vmem>>, vector<8x32xf32>
      %151 = vector.extract_strided_slice %148 {offsets = [0, 0], sizes = [8, 1], strides = [1, 1]} : vector<8x4xf32> to vector<8x1xf32>
      %152 = vector.broadcast %151 : vector<8x1xf32> to vector<8x32xf32>
      %153 = arith.mulf %150, %152 : vector<8x32xf32>
      %154 = vector.extract_strided_slice %149 {offsets = [0, 0], sizes = [1, 32], strides = [1, 1]} : vector<1x128xf32> to vector<1x32xf32>
      %155 = vector.broadcast %154 : vector<1x32xf32> to vector<8x32xf32>
      %156 = arith.addf %153, %155 : vector<8x32xf32>
      %c0_75 = arith.constant 0 : index
      %c0_76 = arith.constant 0 : index
      %157 = vector.load %arg14[%c0_75, %c0_76] : memref<8x128xf32, #tpu.memory_space<vmem>>, vector<8x32xf32>
      tpu.vector_store %arg14[%c0_75, %c0_76], %156 {strides = array<i32>} : memref<8x128xf32, #tpu.memory_space<vmem>>, vector<8x32xf32>,
      %c0_77 = arith.constant 0 : index
      %c32_78 = arith.constant 32 : index
      %158 = vector.load %arg14[%c0_77, %c32_78] : memref<8x128xf32, #tpu.memory_space<vmem>>, vector<8x32xf32>
      %159 = vector.extract_strided_slice %148 {offsets = [0, 1], sizes = [8, 1], strides = [1, 1]} : vector<8x4xf32> to vector<8x1xf32>
      %160 = vector.broadcast %159 : vector<8x1xf32> to vector<8x32xf32>
      %161 = arith.mulf %158, %160 : vector<8x32xf32>
      %162 = vector.extract_strided_slice %149 {offsets = [0, 32], sizes = [1, 32], strides = [1, 1]} : vector<1x128xf32> to vector<1x32xf32>
      %163 = vector.broadcast %162 : vector<1x32xf32> to vector<8x32xf32>
      %164 = arith.addf %161, %163 : vector<8x32xf32>
      %c0_79 = arith.constant 0 : index
      %c32_80 = arith.constant 32 : index
      %165 = vector.load %arg14[%c0_79, %c32_80] : memref<8x128xf32, #tpu.memory_space<vmem>>, vector<8x32xf32>
      tpu.vector_store %arg14[%c0_79, %c32_80], %164 {strides = array<i32>} : memref<8x128xf32, #tpu.memory_space<vmem>>, vector<8x32xf32>,
      %c0_81 = arith.constant 0 : index
      %c64_82 = arith.constant 64 : index
      %166 = vector.load %arg14[%c0_81, %c64_82] : memref<8x128xf32, #tpu.memory_space<vmem>>, vector<8x32xf32>
      %167 = vector.extract_strided_slice %148 {offsets = [0, 2], sizes = [8, 1], strides = [1, 1]} : vector<8x4xf32> to vector<8x1xf32>
      %168 = vector.broadcast %167 : vector<8x1xf32> to vector<8x32xf32>
      %169 = arith.mulf %166, %168 : vector<8x32xf32>
      %170 = vector.extract_strided_slice %149 {offsets = [0, 64], sizes = [1, 32], strides = [1, 1]} : vector<1x128xf32> to vector<1x32xf32>
      %171 = vector.broadcast %170 : vector<1x32xf32> to vector<8x32xf32>
      %172 = arith.addf %169, %171 : vector<8x32xf32>
      %c0_83 = arith.constant 0 : index
      %c64_84 = arith.constant 64 : index
      %173 = vector.load %arg14[%c0_83, %c64_84] : memref<8x128xf32, #tpu.memory_space<vmem>>, vector<8x32xf32>
      tpu.vector_store %arg14[%c0_83, %c64_84], %172 {strides = array<i32>} : memref<8x128xf32, #tpu.memory_space<vmem>>, vector<8x32xf32>,
      %c0_85 = arith.constant 0 : index
      %c96_86 = arith.constant 96 : index
      %174 = vector.load %arg14[%c0_85, %c96_86] : memref<8x128xf32, #tpu.memory_space<vmem>>, vector<8x32xf32>
      %175 = vector.extract_strided_slice %148 {offsets = [0, 3], sizes = [8, 1], strides = [1, 1]} : vector<8x4xf32> to vector<8x1xf32>
      %176 = vector.broadcast %175 : vector<8x1xf32> to vector<8x32xf32>
      %177 = arith.mulf %174, %176 : vector<8x32xf32>
      %178 = vector.extract_strided_slice %149 {offsets = [0, 96], sizes = [1, 32], strides = [1, 1]} : vector<1x128xf32> to vector<1x32xf32>
      %179 = vector.broadcast %178 : vector<1x32xf32> to vector<8x32xf32>
      %180 = arith.addf %177, %179 : vector<8x32xf32>
      %c0_87 = arith.constant 0 : index
      %c96_88 = arith.constant 96 : index
      %181 = vector.load %arg14[%c0_87, %c96_88] : memref<8x128xf32, #tpu.memory_space<vmem>>, vector<8x32xf32>
      tpu.vector_store %arg14[%c0_87, %c96_88], %180 {strides = array<i32>} : memref<8x128xf32, #tpu.memory_space<vmem>>, vector<8x32xf32>,
      %c0_89 = arith.constant 0 : index
      %c0_90 = arith.constant 0 : index
      %182 = vector.load %arg14[%c0_89, %c0_90] : memref<8x128xf32, #tpu.memory_space<vmem>>, vector<8x128xf32>
      %cst_91 = arith.constant 0.000000e+00 : f32
      %183 = vector.broadcast %cst_91 : f32 to vector<8x128xf32>
      %184 = arith.maximumf %182, %183 : vector<8x128xf32>
      %185 = arith.truncf %184 : vector<8x128xf32> to vector<8x128xbf16>
      %c0_92 = arith.constant 0 : index
      %c0_93 = arith.constant 0 : index
      %186 = vector.load %arg7[%c0_92, %c0_93] : memref<128x128xbf16, #tpu.memory_space<vmem>>, vector<128x128xbf16>
      %cst_94 = arith.constant dense<0.000000e+00> : vector<8x128xf32>
      %187 = tpu.matmul %185, %186, %cst_94 {dimension_numbers = #tpu.dot_dimension_numbers<[1], [0], [0], [1], [0, 0, 1, 1], [], []>} : vector<8x128xbf16>, vector<128x128xbf16>, vector<8x128xf32> -> vector<8x128xf32>
      %188 = arith.truncf %187 : vector<8x128xf32> to vector<8x128xbf16>
      %c0_95 = arith.constant 0 : index
      %c0_96 = arith.constant 0 : index
      %189 = vector.load %arg8[%c0_95, %c0_96] : memref<128x2xbf16, #tpu.memory_space<vmem>>, vector<128x2xbf16>
      %cst_97 = arith.constant dense<0.000000e+00> : vector<8x2xf32>
      %190 = tpu.matmul %188, %189, %cst_97 {dimension_numbers = #tpu.dot_dimension_numbers<[1], [0], [0], [1], [0, 0, 1, 1], [], []>} : vector<8x128xbf16>, vector<128x2xbf16>, vector<8x2xf32> -> vector<8x2xf32>
      %c0_98 = arith.constant 0 : index
      %c0_99 = arith.constant 0 : index
      %191 = vector.load %arg9[%c0_98, %c0_99] : memref<8x128xbf16, #tpu.memory_space<vmem>>, vector<8x128xbf16>
      tpu.vector_store %arg9[%c0_98, %c0_99], %188 {strides = array<i32>} : memref<8x128xbf16, #tpu.memory_space<vmem>>, vector<8x128xbf16>,
      %192 = vector.extract_strided_slice %190 {offsets = [0, 0], sizes = [8, 1], strides = [1, 1]} : vector<8x2xf32> to vector<8x1xf32>
      %193 = tpu.transpose %192, [1, 0] : vector<8x1xf32> -> vector<1x8xf32>
      %c0_100 = arith.constant 0 : index
      %c0_101 = arith.constant 0 : index
      %194 = vector.load %arg10[%c0_100, %c0_101] : memref<1x8xf32, #tpu.memory_space<vmem>>, vector<1x8xf32>
      tpu.vector_store %arg10[%c0_100, %c0_101], %193 {strides = array<i32>} : memref<1x8xf32, #tpu.memory_space<vmem>>, vector<1x8xf32>,
      %195 = vector.extract_strided_slice %190 {offsets = [0, 1], sizes = [8, 1], strides = [1, 1]} : vector<8x2xf32> to vector<8x1xf32>
      %c0_102 = arith.constant 0 : index
      %c0_103 = arith.constant 0 : index
      %196 = vector.load %arg11[%c0_102, %c0_103] : memref<8x1xf32, #tpu.memory_space<vmem>>, vector<8x1xf32>
      tpu.vector_store %arg11[%c0_102, %c0_103], %195 {strides = array<i32>} : memref<8x1xf32, #tpu.memory_space<vmem>>, vector<8x1xf32>,
    } else {
    }
    return
  }
  func.func @transform_0(%arg0: i32, %arg1: i32) -> (i32, i32) {
    %c0_i32 = arith.constant 0 : i32
    return %arg0, %arg1 : i32, i32
  }
  func.func @transform_1(%arg0: i32, %arg1: i32) -> (i32, i32) {
    %c0_i32 = arith.constant 0 : i32
    %c0_i32_0 = arith.constant 0 : i32
    return %arg0, %c0_i32 : i32, i32
  }
  func.func @transform_2(%arg0: i32, %arg1: i32) -> (i32, i32) {
    %c0_i32 = arith.constant 0 : i32
    %c0_i32_0 = arith.constant 0 : i32
    return %c0_i32, %arg1 : i32, i32
  }
  func.func @transform_3(%arg0: i32, %arg1: i32) -> (i32, i32) {
    %c0_i32 = arith.constant 0 : i32
    %c0_i32_0 = arith.constant 0 : i32
    return %arg1, %c0_i32 : i32, i32
  }
  func.func @transform_4(%arg0: i32, %arg1: i32) -> (i32, i32) {
    %c0_i32 = arith.constant 0 : i32
    %c0_i32_0 = arith.constant 0 : i32
    %c0_i32_1 = arith.constant 0 : i32
    return %c0_i32, %c0_i32_0 : i32, i32
  }
  func.func @transform_5(%arg0: i32, %arg1: i32) -> (i32, i32) {
    %c0_i32 = arith.constant 0 : i32
    %c0_i32_0 = arith.constant 0 : i32
    %c0_i32_1 = arith.constant 0 : i32
    return %c0_i32, %c0_i32_0 : i32, i32
  }
  func.func @transform_6(%arg0: i32, %arg1: i32) -> (i32, i32) {
    %c0_i32 = arith.constant 0 : i32
    %c0_i32_0 = arith.constant 0 : i32
    %c0_i32_1 = arith.constant 0 : i32
    return %c0_i32, %c0_i32_0 : i32, i32
  }
  func.func @transform_7(%arg0: i32, %arg1: i32) -> (i32, i32) {
    %c0_i32 = arith.constant 0 : i32
    %c0_i32_0 = arith.constant 0 : i32
    return %arg0, %c0_i32 : i32, i32
  }
  func.func @transform_8(%arg0: i32, %arg1: i32) -> (i32, i32) {
    %c0_i32 = arith.constant 0 : i32
    %c0_i32_0 = arith.constant 0 : i32
    return %c0_i32, %arg0 : i32, i32
  }
  func.func @transform_9(%arg0: i32, %arg1: i32) -> (i32, i32) {
    %c0_i32 = arith.constant 0 : i32
    %c0_i32_0 = arith.constant 0 : i32
    return %arg0, %c0_i32 : i32, i32
  }
}

</mosaic_0001>

<llo_original>
// kernel: gat_model_forward.3
$region0: #{gat_model_forward.3}
  #allocation0 [shape = 'u32[]', space=smem, size = 0x4, offset = 0x4, fixed_abs, tag = 'smem constant byte address 0x4 - core index']
  #allocation1 [shape = 'u32[72,128]{1,0:T(1,128)}', space=vmem, size = 0x9000, scoped, tag = 'internal scratch']
  %s0 = inlined_call_operand.vmem [shape: bf16[8,16], index: 0, kind: input, shape index: {}]
  %s1 = inlined_call_operand.vmem [shape: bf16[16,128], index: 1, kind: input, shape index: {}]
  %s2 = inlined_call_operand.vmem [shape: bf16[128,8], index: 2, kind: input, shape index: {}]
  %s3 = inlined_call_operand.vmem [shape: bf16[8,128], index: 3, kind: output, shape index: {0}]
  %s4 = inlined_call_operand.vmem [shape: f32[4,8], index: 4, kind: output, shape index: {1}]
  %s5 = inlined_call_operand.vmem [shape: f32[8,4], index: 5, kind: output, shape index: {2}]
  %6 = xla_tuple %s3, %s4, %s5
  %s7 = sld [smem:[#allocation0]]
  $region38: #{gat_model_forward.3} parent=0
    _
  %s9 = ssub.s32 1, %s7
  %s10 = scalar_select 0, %s9, %s7
  // Predicated region
  $region2: #{gat_model_forward.3} parent=0 // pred_check
    _
  $region3: #{gat_model_forward.3} parent=0 // pred_check_branch
    %12 = sbr.rel (0) target = $region5
  $region4: #{gat_model_forward.3} parent=0 // pred_region
    _
  $region5: #{gat_model_forward.3} parent=0 // pred_fallthru
    _
  // Predicated region
  $region6: #{gat_model_forward.3} parent=0 // pred_check
    _
  $region7: #{gat_model_forward.3} parent=0 // pred_check_branch
    %14 = sbr.rel (0) target = $region9
  $region8: #{gat_model_forward.3} parent=0 // pred_region
    _
  $region9: #{gat_model_forward.3} parent=0 // pred_fallthru
    _
  // Predicated region
  $region10: #{gat_model_forward.3} parent=0 // pred_check
    _
  $region11: #{gat_model_forward.3} parent=0 // pred_check_branch
    %16 = sbr.rel (0) target = $region13
  $region12: #{gat_model_forward.3} parent=0 // pred_region
    _
  $region13: #{gat_model_forward.3} parent=0 // pred_fallthru
    _
  %v18 = vld [vmem:[%s0] sm:$0xf]
  %v19 = vld [vmem:[%s1] sm:$0xf]
  %v20 = vld [vmem:[%s1 + $0x4] sm:$0xf]
  %v23 = vunpack.c.l.b16 %v19
  %v24 = vunpack.c.l.b16 %v20
  %v25 = vpack.c.b16 %v24, %v23
  %vm27 = vcmask 130048
  %v29 = vsel %vm27, %v18, 0
  %31 = vmatpush.bf16.msra.mxu0 0
  %32 = vmatpush.bf16.msra.mxu0 0
  %33 = vmatpush.bf16.msra.mxu0 0
  %34 = vmatpush.bf16.msra.mxu0 0
  %35 = vmatpush.bf16.msra.mxu0 0
  %36 = vmatpush.bf16.msra.mxu0 0
  %37 = vmatpush.bf16.msra.mxu0 0
  %38 = vmatpush.bf16.msra.mxu0 %v25
  %39 = vmatmul.bf16.gmra.mxu0 %v29
  %v40 = vpop.f32.mrf.mxu0
  %v41 = vadd.f32 0.0, %v40
  %v42 = vpop.f32.mrf.mxu0
  %43 = vdwg.mxu0
  %v44 = vpack.c.bf16 %v41, %v41
  %v45 = vld [vmem:[%s2] sm:$0xf]
  %v46 = vld [vmem:[%s2 + $0x4] sm:$0xf]
  %v47 = vld [vmem:[%s2 + $0x8] sm:$0xf]
  %v48 = vld [vmem:[%s2 + $0xc] sm:$0xf]
  %v49 = vld [vmem:[%s2 + $0x10] sm:$0xf]
  %v50 = vld [vmem:[%s2 + $0x14] sm:$0xf]
  %v51 = vld [vmem:[%s2 + $0x18] sm:$0xf]
  %v52 = vld [vmem:[%s2 + $0x1c] sm:$0xf]
  %v53 = vld [vmem:[%s2 + $0x20] sm:$0xf]
  %v54 = vld [vmem:[%s2 + $0x24] sm:$0xf]
  %v55 = vld [vmem:[%s2 + $0x28] sm:$0xf]
  %v56 = vld [vmem:[%s2 + $0x2c] sm:$0xf]
  %v57 = vld [vmem:[%s2 + $0x30] sm:$0xf]
  %v58 = vld [vmem:[%s2 + $0x34] sm:$0xf]
  %v59 = vld [vmem:[%s2 + $0x38] sm:$0xf]
  %v60 = vld [vmem:[%s2 + $0x3c] sm:$0xf]
  %v77 = vunpack.c.l.b16 %v45
  %v78 = vunpack.c.l.b16 %v46
  %v79 = vunpack.c.l.b16 %v47
  %v80 = vunpack.c.l.b16 %v48
  %v81 = vunpack.c.l.b16 %v49
  %v82 = vunpack.c.l.b16 %v50
  %v83 = vunpack.c.l.b16 %v51
  %v84 = vunpack.c.l.b16 %v52
  %v85 = vunpack.c.l.b16 %v53
  %v86 = vunpack.c.l.b16 %v54
  %v87 = vunpack.c.l.b16 %v55
  %v88 = vunpack.c.l.b16 %v56
  %v89 = vunpack.c.l.b16 %v57
  %v90 = vunpack.c.l.b16 %v58
  %v91 = vunpack.c.l.b16 %v59
  %v92 = vunpack.c.l.b16 %v60
  %v93 = vpack.c.b16 %v78, %v77
  %v94 = vpack.c.b16 %v80, %v79
  %v95 = vpack.c.b16 %v82, %v81
  %v96 = vpack.c.b16 %v84, %v83
  %v97 = vpack.c.b16 %v86, %v85
  %v98 = vpack.c.b16 %v88, %v87
  %v99 = vpack.c.b16 %v90, %v89
  %v100 = vpack.c.b16 %v92, %v91
  %109 = vmatpush.bf16.msra.mxu0 %v100
  %110 = vmatpush.bf16.msra.mxu0 %v99
  %111 = vmatpush.bf16.msra.mxu0 %v98
  %112 = vmatpush.bf16.msra.mxu0 %v97
  %113 = vmatpush.bf16.msra.mxu0 %v96
  %114 = vmatpush.bf16.msra.mxu0 %v95
  %115 = vmatpush.bf16.msra.mxu0 %v94
  %116 = vmatpush.bf16.msra.mxu0 %v93
  %117 = vmatmul.bf16.gmra.mxu0 %v44
  %v118 = vpop.f32.mrf.mxu0
  %v119 = vadd.f32 0.0, %v118
  %v120 = vpop.f32.mrf.mxu0
  %121 = vdwg.mxu0
  %122 = vst [vmem:[%s3] sm:$0xf] %v44
  %123 = vxpose.xlu0.b32.start [1/16] %v119, 128
  %124 = vxpose.xlu0.b32.cont [2/16] 0.0, 128
  %125 = vxpose.xlu0.b32.cont [3/16] 0.0, 128
  %126 = vxpose.xlu0.b32.cont [4/16] 0.0, 128
  %127 = vxpose.xlu0.b32.cont [5/16] 0.0, 128
  %128 = vxpose.xlu0.b32.cont [6/16] 0.0, 128
  %129 = vxpose.xlu0.b32.cont [7/16] 0.0, 128
  %130 = vxpose.xlu0.b32.cont [8/16] 0.0, 128
  %131 = vxpose.xlu0.b32.cont [9/16] 0.0, 128
  %132 = vxpose.xlu0.b32.cont [10/16] 0.0, 128
  %133 = vxpose.xlu0.b32.cont [11/16] 0.0, 128
  %134 = vxpose.xlu0.b32.cont [12/16] 0.0, 128
  %135 = vxpose.xlu0.b32.cont [13/16] 0.0, 128
  %136 = vxpose.xlu0.b32.cont [14/16] 0.0, 128
  %137 = vxpose.xlu0.b32.cont [15/16] 0.0, 128
  %138 = vxpose.xlu0.b32.end [16/16] 0.0, 128
  %v139 = vpop.trf.xlu0
  %v140 = vpop.trf.xlu0
  %v141 = vpop.trf.xlu0
  %v142 = vpop.trf.xlu0
  %v143 = vpop.trf.xlu0
  %v144 = vpop.trf.xlu0
  %v145 = vpop.trf.xlu0
  %v146 = vpop.trf.xlu0
  %v147 = vpop.trf.xlu0
  %v148 = vpop.trf.xlu0
  %v149 = vpop.trf.xlu0
  %v150 = vpop.trf.xlu0
  %v151 = vpop.trf.xlu0
  %v152 = vpop.trf.xlu0
  %v153 = vpop.trf.xlu0
  %v154 = vpop.trf.xlu0
  %vm155 = vcmask 60416
  %156 = vst.msk [vmem:[%s4] sm:$0xf] %vm155, %v139
  %158 = vrot.lane.b32.xlu0 %v119, 124
  %v159 = vpop.permute.xlu0 %158
  %vm161 = vcmask 31744
  %162 = vst.msk [vmem:[%s5] sm:$0xff] %vm161, %v159
  // Predicated region
  $region14: #{gat_model_forward.3} parent=0 // pred_check
    _
  $region15: #{gat_model_forward.3} parent=0 // pred_check_branch
    %164 = sbr.rel (0) target = $region17
  $region16: #{gat_model_forward.3} parent=0 // pred_region
    _
  $region17: #{gat_model_forward.3} parent=0 // pred_fallthru
    _
  // Predicated region
  $region18: #{gat_model_forward.3} parent=0 // pred_check
    _
  $region19: #{gat_model_forward.3} parent=0 // pred_check_branch
    %166 = sbr.rel (0) target = $region21
  $region20: #{gat_model_forward.3} parent=0 // pred_region
    _
  $region21: #{gat_model_forward.3} parent=0 // pred_fallthru
    _
  // Predicated region
  $region22: #{gat_model_forward.3} parent=0 // pred_check
    _
  $region23: #{gat_model_forward.3} parent=0 // pred_check_branch
    %168 = sbr.rel (0) target = $region25
  $region24: #{gat_model_forward.3} parent=0 // pred_region
    _
  $region25: #{gat_model_forward.3} parent=0 // pred_fallthru
    _
  // Predicated region
  $region26: #{gat_model_forward.3} parent=0 // pred_check
    _
  $region27: #{gat_model_forward.3} parent=0 // pred_check_branch
    %170 = sbr.rel (0) target = $region29
  $region28: #{gat_model_forward.3} parent=0 // pred_region
    _
  $region29: #{gat_model_forward.3} parent=0 // pred_fallthru
    _
  // Predicated region
  $region30: #{gat_model_forward.3} parent=0 // pred_check
    _
  $region31: #{gat_model_forward.3} parent=0 // pred_check_branch
    %172 = sbr.rel (0) target = $region33
  $region32: #{gat_model_forward.3} parent=0 // pred_region
    _
  $region33: #{gat_model_forward.3} parent=0 // pred_fallthru
    _
  // Predicated region
  $region34: #{gat_model_forward.3} parent=0 // pred_check
    _
  $region35: #{gat_model_forward.3} parent=0 // pred_check_branch
    %174 = sbr.rel (0) target = $region37
  $region36: #{gat_model_forward.3} parent=0 // pred_region
    _
  $region37: #{gat_model_forward.3} parent=0 // pred_fallthru
    _

// kernel: gat_model_forward.5
$region0: #{gat_model_forward.5}
  #allocation0 [shape = 'u32[]', space=smem, size = 0x4, offset = 0x4, fixed_abs, tag = 'smem constant byte address 0x4 - core index']
  #allocation1 [shape = 'u32[72,128]{1,0:T(1,128)}', space=vmem, size = 0x9000, scoped, tag = 'internal scratch']
  #allocation2 [shape = 'f32[8,1]{1,0:T(8,128)}', space=vmem, size = 0x1000, scoped, tag = 'scratch operand']
  #allocation3 [shape = 'f32[8,1]{1,0:T(8,128)}', space=vmem, size = 0x1000, scoped, tag = 'scratch operand']
  #allocation4 [shape = 'f32[8,128]{1,0:T(8,128)}', space=vmem, size = 0x1000, scoped, tag = 'scratch operand']
  %s0 = inlined_call_operand.vmem [shape: s8[8,8], index: 0, kind: input, shape index: {}]
  %s1 = inlined_call_operand.vmem [shape: f32[8,1], index: 1, kind: input, shape index: {}]
  %s2 = inlined_call_operand.vmem [shape: f32[1,8], index: 2, kind: input, shape index: {}]
  %s3 = inlined_call_operand.vmem [shape: bf16[8,128], index: 3, kind: input, shape index: {}]
  %s4 = inlined_call_operand.vmem [shape: f32[1,128], index: 4, kind: input, shape index: {}]
  %s5 = inlined_call_operand.vmem [shape: bf16[128,128], index: 5, kind: input, shape index: {}]
  %s6 = inlined_call_operand.vmem [shape: f32[1,128], index: 6, kind: input, shape index: {}]
  %s7 = inlined_call_operand.hbm [shape: f32[8,128], index: 7, kind: output, shape index: {}]
  %s8 = sld [smem:[#allocation0]]
  $region46: #{gat_model_forward.5} parent=0
    _
  %s10 = ssub.s32 1, %s8
  %s11 = scalar_select 0, %s10, %s8
  $region1: #{gat_model_forward.5} parent=0
    #allocation5 [shape = 'u8[4096]{0}', space=vmem, size = 0x1000, scoped, tag = 'output window, operand 0, single buffered']
    #allocation6 [shape = 's32[1]{0}', space=sflag, size = 0x4, scoped, tag = 'scoped memory for gat_model_forward.5']
    %12 = vsyncpa [#allocation6], 0
    // Predicated region
    $region2: #{gat_model_forward.5} parent=1 // pred_check
      _
    $region3: #{gat_model_forward.5} parent=1 // pred_check_branch
      %14 = sbr.rel (0) target = $region5
    $region4: #{gat_model_forward.5} parent=1 // pred_region
      _
    $region5: #{gat_model_forward.5} parent=1 // pred_fallthru
      _
    // Predicated region
    $region6: #{gat_model_forward.5} parent=1 // pred_check
      _
    $region7: #{gat_model_forward.5} parent=1 // pred_check_branch
      %16 = sbr.rel (0) target = $region9
    $region8: #{gat_model_forward.5} parent=1 // pred_region
      _
    $region9: #{gat_model_forward.5} parent=1 // pred_fallthru
      _
    // Predicated region
    $region10: #{gat_model_forward.5} parent=1 // pred_check
      _
    $region11: #{gat_model_forward.5} parent=1 // pred_check_branch
      %18 = sbr.rel (0) target = $region13
    $region12: #{gat_model_forward.5} parent=1 // pred_region
      _
    $region13: #{gat_model_forward.5} parent=1 // pred_fallthru
      _
    // Predicated region
    $region14: #{gat_model_forward.5} parent=1 // pred_check
      _
    $region15: #{gat_model_forward.5} parent=1 // pred_check_branch
      %20 = sbr.rel (0) target = $region17
    $region16: #{gat_model_forward.5} parent=1 // pred_region
      _
    $region17: #{gat_model_forward.5} parent=1 // pred_fallthru
      _
    // Predicated region
    $region18: #{gat_model_forward.5} parent=1 // pred_check
      _
    $region19: #{gat_model_forward.5} parent=1 // pred_check_branch
      %22 = sbr.rel (0) target = $region21
    $region20: #{gat_model_forward.5} parent=1 // pred_region
      _
    $region21: #{gat_model_forward.5} parent=1 // pred_fallthru
      _
    // Predicated region
    $region22: #{gat_model_forward.5} parent=1 // pred_check
      _
    $region23: #{gat_model_forward.5} parent=1 // pred_check_branch
      %24 = sbr.rel (0) target = $region25
    $region24: #{gat_model_forward.5} parent=1 // pred_region
      _
    $region25: #{gat_model_forward.5} parent=1 // pred_fallthru
      _
    // Predicated region
    $region26: #{gat_model_forward.5} parent=1 // pred_check
      _
    $region27: #{gat_model_forward.5} parent=1 // pred_check_branch
      %26 = sbr.rel (0) target = $region29
    $region28: #{gat_model_forward.5} parent=1 // pred_region
      _
    $region29: #{gat_model_forward.5} parent=1 // pred_fallthru
      _
    %p28 = scmp.eq.s32.totalorder 0, 0
    // Predicated region
    $region30: #{gat_model_forward.5} parent=1 // pred_check
      %p29 = pneg %p28
    $region31: #{gat_model_forward.5} parent=1 // pred_check_branch
      %31 = sbr.rel (%p29) target = $region33
    $region32: #{gat_model_forward.5} parent=1 // pred_region
      %vm32 = vcmask 7168
      %33 = vst.msk [vmem:[#allocation2] sm:$0xff] %vm32, -inf
      %34 = vst.msk [vmem:[#allocation3] sm:$0xff] %vm32, 0.0
      %35 = vst [vmem:[#allocation4] sm:$0xff] 0.0
    $region33: #{gat_model_forward.5} parent=1 // pred_fallthru
      _
    %v36 = vld [vmem:[%s0] sm:$0x3]
    %v37 = vunpack.c.0.s8 %v36
    %v38 = vcvt.s32.f32 %v37
    %v39 = vsub.f32 %v38, 1.0
    %v40 = vmul.f32 %v39, 1e+30
    %v41 = vld [vmem:[%s1] sm:$0xff]
    %v42 = vld [vmem:[%s2] sm:$0x1]
    %44 = vset.pattern.permute.xlu0 0
    %45 = vperm.xlu0 %44, %v41
    %v46 = vpop.permute.xlu0 %45
    %v49 = vperm.slane %v42, 0
    %v51 = vadd.f32 %v46, %v49
    %v52 = vmul.f32 %v51, 0.2
    %v53 = vmax.f32 %v51, %v52
    %v54 = vadd.f32 %v53, %v40
    %v55 = vld [vmem:[#allocation2] sm:$0xff]
    %vm56 = vcmask 64512
    %v57 = vsel %vm56, %v54, -inf
    %58 = vmax.xlane.f32.xlu0 %v57
    %v59 = vpop.xlane.xlu0 %58
    %v60 = vmax.f32 %v55, %v59
    %v61 = vsub.f32 %v55, %v60
    %v62 = vmul.f32 %v61, 1.442695
    %v63 = vpow.pop %v62
    %65 = vset.pattern.permute.xlu0 0
    %66 = vperm.xlu0 %65, %v60
    %v67 = vpop.permute.xlu0 %66
    %v69 = vsub.f32 %v54, %v67
    %v70 = vmul.f32 %v69, 1.442695
    %v71 = vpow.pop %v70
    %v72 = vld [vmem:[#allocation3] sm:$0xff]
    %v73 = vmul.f32 %v63, %v72
    %v74 = vsel %vm56, %v71, 0.0
    %75 = vadd.xlane.f32.xlu0 %v74
    %v76 = vpop.xlane.xlu0 %75
    %v77 = vadd.f32 %v73, %v76
    %vm78 = vcmask 7168
    %79 = vst.msk [vmem:[#allocation3] sm:$0xff] %vm78, %v77
    %v80 = vld [vmem:[#allocation4] sm:$0xff]
    %82 = vset.pattern.permute.xlu0 0
    %83 = vperm.xlu0 %82, %v63
    %v84 = vpop.permute.xlu0 %83
    %v86 = vmul.f32 %v84, %v80
    %v87 = vpack.c.bf16 %v71, %v71
    %v88 = vld [vmem:[%s3] sm:$0xf]
    %v90 = vsel %vm56, %v87, 0
    %vm92 = vcmask 1043456
    %v94 = vsel %vm92, %v88, 0
    %96 = vmatpush.bf16.msra.mxu0 0
    %97 = vmatpush.bf16.msra.mxu0 0
    %98 = vmatpush.bf16.msra.mxu0 0
    %99 = vmatpush.bf16.msra.mxu0 0
    %100 = vmatpush.bf16.msra.mxu0 0
    %101 = vmatpush.bf16.msra.mxu0 0
    %102 = vmatpush.bf16.msra.mxu0 0
    %103 = vmatpush.bf16.msra.mxu0 %v94
    %104 = vmatmul.bf16.gmra.mxu0 %v90
    %v105 = vpop.f32.mrf.mxu0
    %v106 = vadd.f32 0.0, %v105
    %v107 = vpop.f32.mrf.mxu0
    %108 = vdwg.mxu0
    %v109 = vadd.f32 %v86, %v106
    %110 = vst [vmem:[#allocation4] sm:$0xff] %v109
    %111 = vst.msk [vmem:[#allocation2] sm:$0xff] %vm78, %v60
    // Predicated region
    $region34: #{gat_model_forward.5} parent=1 // pred_check
      %p112 = pneg %p28
    $region35: #{gat_model_forward.5} parent=1 // pred_check_branch
      %114 = sbr.rel (%p112) target = $region37
    $region36: #{gat_model_forward.5} parent=1 // pred_region
      %v115 = vld [vmem:[#allocation3] sm:$0xff]
      %v116 = vrcp.pop %v115
      %v117 = vld [vmem:[#allocation4] sm:$0xff]
      %119 = vset.pattern.permute.xlu0 0
      %120 = vperm.xlu0 %119, %v116
      %v121 = vpop.permute.xlu0 %120
      %v123 = vmul.f32 %v117, %v121
      %v124 = vld [vmem:[%s4] sm:$0x1]
      %v126 = vperm.slane %v124, 0
      %v128 = vadd.f32 %v123, %v126
      %v129 = vpack.c.bf16 %v128, %v128
      %v130 = vld [vmem:[%s5] sm:$0xf]
      %v131 = vld [vmem:[%s5 + $0x4] sm:$0xf]
      %v132 = vld [vmem:[%s5 + $0x8] sm:$0xf]
      %v133 = vld [vmem:[%s5 + $0xc] sm:$0xf]
      %v134 = vld [vmem:[%s5 + $0x10] sm:$0xf]
      %v135 = vld [vmem:[%s5 + $0x14] sm:$0xf]
      %v136 = vld [vmem:[%s5 + $0x18] sm:$0xf]
      %v137 = vld [vmem:[%s5 + $0x1c] sm:$0xf]
      %v138 = vld [vmem:[%s5 + $0x20] sm:$0xf]
      %v139 = vld [vmem:[%s5 + $0x24] sm:$0xf]
      %v140 = vld [vmem:[%s5 + $0x28] sm:$0xf]
      %v141 = vld [vmem:[%s5 + $0x2c] sm:$0xf]
      %v142 = vld [vmem:[%s5 + $0x30] sm:$0xf]
      %v143 = vld [vmem:[%s5 + $0x34] sm:$0xf]
      %v144 = vld [vmem:[%s5 + $0x38] sm:$0xf]
      %v145 = vld [vmem:[%s5 + $0x3c] sm:$0xf]
      %v146 = vld [vmem:[%s6] sm:$0x1]
      %v148 = vperm.slane %v146, 0
      %v166 = vunpack.c.l.b16 %v130
      %v167 = vunpack.c.l.b16 %v131
      %v168 = vunpack.c.l.b16 %v132
      %v169 = vunpack.c.l.b16 %v133
      %v170 = vunpack.c.l.b16 %v134
      %v171 = vunpack.c.l.b16 %v135
      %v172 = vunpack.c.l.b16 %v136
      %v173 = vunpack.c.l.b16 %v137
      %v174 = vunpack.c.l.b16 %v138
      %v175 = vunpack.c.l.b16 %v139
      %v176 = vunpack.c.l.b16 %v140
      %v177 = vunpack.c.l.b16 %v141
      %v178 = vunpack.c.l.b16 %v142
      %v179 = vunpack.c.l.b16 %v143
      %v180 = vunpack.c.l.b16 %v144
      %v181 = vunpack.c.l.b16 %v145
      %v182 = vpack.c.b16 %v167, %v166
      %v183 = vpack.c.b16 %v169, %v168
      %v184 = vpack.c.b16 %v171, %v170
      %v185 = vpack.c.b16 %v173, %v172
      %v186 = vpack.c.b16 %v175, %v174
      %v187 = vpack.c.b16 %v177, %v176
      %v188 = vpack.c.b16 %v179, %v178
      %v189 = vpack.c.b16 %v181, %v180
      %198 = vmatpush.bf16.msra.mxu0 %v189
      %199 = vmatpush.bf16.msra.mxu0 %v188
      %200 = vmatpush.bf16.msra.mxu0 %v187
      %201 = vmatpush.bf16.msra.mxu0 %v186
      %202 = vmatpush.bf16.msra.mxu0 %v185
      %203 = vmatpush.bf16.msra.mxu0 %v184
      %204 = vmatpush.bf16.msra.mxu0 %v183
      %205 = vmatpush.bf16.msra.mxu0 %v182
      %206 = vmatmul.bf16.gmra.mxu0 %v129
      %v207 = vpop.f32.mrf.mxu0
      %v208 = vadd.f32 %v148, %v207
      %v209 = vpop.f32.mrf.mxu0
      %210 = vdwg.mxu0
      %211 = vst [vmem:[#allocation5] sm:$0xff] %v208
    $region37: #{gat_model_forward.5} parent=1 // pred_fallthru
      _
    // Predicated region
    $region38: #{gat_model_forward.5} parent=1 // pred_check
      _
    $region39: #{gat_model_forward.5} parent=1 // pred_check_branch
      %213 = sbr.rel (0) target = $region41
    $region40: #{gat_model_forward.5} parent=1 // pred_region
      %215 = vsyncadd [#allocation6], 0
      %s217 = sshll.u32 [#allocation5], 4
      %s218 = int_to_ptr.vmem [resolvable:$true] %s217
      %s219 = sshll.u32 %s7, 4
      %s220 = int_to_ptr.hbm [resolvable:$true] %s219
      %222 = dma.vmem_to_hbm [thread:$0]  %s218, 128, %s220, [#allocation6]
    $region41: #{gat_model_forward.5} parent=1 // pred_fallthru
      _
    // Predicated region
    $region42: #{gat_model_forward.5} parent=1 // pred_check
      _
    $region43: #{gat_model_forward.5} parent=1 // pred_check_branch
      %224 = sbr.rel (0) target = $region45
    $region44: #{gat_model_forward.5} parent=1 // pred_region
      %226 = dma.done [#allocation6], 128
    $region45: #{gat_model_forward.5} parent=1 // pred_fallthru
      _
    %227 = vsyncpa [#allocation6], 1

// kernel: gat_model_forward.4
$region0: #{gat_model_forward.4}
  #allocation0 [shape = 'u32[]', space=smem, size = 0x4, offset = 0x4, fixed_abs, tag = 'smem constant byte address 0x4 - core index']
  #allocation1 [shape = 'u32[72,128]{1,0:T(1,128)}', space=vmem, size = 0x9000, scoped, tag = 'internal scratch']
  #allocation2 [shape = 'f32[8,4]{1,0:T(8,128)}', space=vmem, size = 0x1000, scoped, tag = 'scratch operand']
  #allocation3 [shape = 'f32[8,4]{1,0:T(8,128)}', space=vmem, size = 0x1000, scoped, tag = 'scratch operand']
  #allocation4 [shape = 'f32[8,128]{1,0:T(8,128)}', space=vmem, size = 0x1000, scoped, tag = 'scratch operand']
  %s0 = inlined_call_operand.vmem [shape: s8[8,8], index: 0, kind: input, shape index: {}]
  %s1 = inlined_call_operand.vmem [shape: f32[8,4], index: 1, kind: input, shape index: {}]
  %s2 = inlined_call_operand.vmem [shape: f32[4,8], index: 2, kind: input, shape index: {}]
  %s3 = inlined_call_operand.vmem [shape: bf16[8,128], index: 3, kind: input, shape index: {}]
  %s4 = inlined_call_operand.vmem [shape: f32[1,128], index: 4, kind: input, shape index: {}]
  %s5 = inlined_call_operand.vmem [shape: bf16[128,128], index: 5, kind: input, shape index: {}]
  %s6 = inlined_call_operand.vmem [shape: bf16[128,2], index: 6, kind: input, shape index: {}]
  %s7 = inlined_call_operand.vmem [shape: bf16[8,128], index: 7, kind: output, shape index: {0}]
  %s8 = inlined_call_operand.vmem [shape: f32[1,8], index: 8, kind: output, shape index: {1}]
  %s9 = inlined_call_operand.vmem [shape: f32[8,1], index: 9, kind: output, shape index: {2}]
  %10 = xla_tuple %s7, %s8, %s9
  %s11 = sld [smem:[#allocation0]]
  $region62: #{gat_model_forward.4} parent=0
    _
  %s13 = ssub.s32 1, %s11
  %s14 = scalar_select 0, %s13, %s11
  // Predicated region
  $region2: #{gat_model_forward.4} parent=0 // pred_check
    _
  $region3: #{gat_model_forward.4} parent=0 // pred_check_branch
    %16 = sbr.rel (0) target = $region5
  $region4: #{gat_model_forward.4} parent=0 // pred_region
    _
  $region5: #{gat_model_forward.4} parent=0 // pred_fallthru
    _
  // Predicated region
  $region6: #{gat_model_forward.4} parent=0 // pred_check
    _
  $region7: #{gat_model_forward.4} parent=0 // pred_check_branch
    %18 = sbr.rel (0) target = $region9
  $region8: #{gat_model_forward.4} parent=0 // pred_region
    _
  $region9: #{gat_model_forward.4} parent=0 // pred_fallthru
    _
  // Predicated region
  $region10: #{gat_model_forward.4} parent=0 // pred_check
    _
  $region11: #{gat_model_forward.4} parent=0 // pred_check_branch
    %20 = sbr.rel (0) target = $region13
  $region12: #{gat_model_forward.4} parent=0 // pred_region
    _
  $region13: #{gat_model_forward.4} parent=0 // pred_fallthru
    _
  // Predicated region
  $region14: #{gat_model_forward.4} parent=0 // pred_check
    _
  $region15: #{gat_model_forward.4} parent=0 // pred_check_branch
    %22 = sbr.rel (0) target = $region17
  $region16: #{gat_model_forward.4} parent=0 // pred_region
    _
  $region17: #{gat_model_forward.4} parent=0 // pred_fallthru
    _
  // Predicated region
  $region18: #{gat_model_forward.4} parent=0 // pred_check
    _
  $region19: #{gat_model_forward.4} parent=0 // pred_check_branch
    %24 = sbr.rel (0) target = $region21
  $region20: #{gat_model_forward.4} parent=0 // pred_region
    _
  $region21: #{gat_model_forward.4} parent=0 // pred_fallthru
    _
  // Predicated region
  $region22: #{gat_model_forward.4} parent=0 // pred_check
    _
  $region23: #{gat_model_forward.4} parent=0 // pred_check_branch
    %26 = sbr.rel (0) target = $region25
  $region24: #{gat_model_forward.4} parent=0 // pred_region
    _
  $region25: #{gat_model_forward.4} parent=0 // pred_fallthru
    _
  // Predicated region
  $region26: #{gat_model_forward.4} parent=0 // pred_check
    _
  $region27: #{gat_model_forward.4} parent=0 // pred_check_branch
    %28 = sbr.rel (0) target = $region29
  $region28: #{gat_model_forward.4} parent=0 // pred_region
    _
  $region29: #{gat_model_forward.4} parent=0 // pred_fallthru
    _
  %p30 = scmp.eq.s32.totalorder 0, 0
  // Predicated region
  $region30: #{gat_model_forward.4} parent=0 // pred_check
    %p31 = pneg %p30
  $region31: #{gat_model_forward.4} parent=0 // pred_check_branch
    %33 = sbr.rel (%p31) target = $region33
  $region32: #{gat_model_forward.4} parent=0 // pred_region
    %vm34 = vcmask 31744
    %35 = vst.msk [vmem:[#allocation2] sm:$0xff] %vm34, -inf
    %36 = vst.msk [vmem:[#allocation3] sm:$0xff] %vm34, 0.0
    %37 = vst [vmem:[#allocation4] sm:$0xff] 0.0
  $region33: #{gat_model_forward.4} parent=0 // pred_fallthru
    _
  %v38 = vld [vmem:[%s0] sm:$0x3]
  %v39 = vunpack.c.0.s8 %v38
  %v40 = vcvt.s32.f32 %v39
  %v41 = vsub.f32 %v40, 1.0
  %v42 = vmul.f32 %v41, 1e+30
  %v43 = vld [vmem:[%s1] sm:$0xff]
  %v44 = vld [vmem:[%s2] sm:$0xf]
  %v45 = vld [vmem:[%s3] sm:$0xf]
  %47 = vset.pattern.permute.xlu0 0
  %48 = vperm.xlu0 %47, %v43
  %v49 = vpop.permute.xlu0 %48
  %v51 = vperm.slane %v44, 0
  %v52 = vadd.f32 %v49, %v51
  %v53 = vmul.f32 %v52, 0.2
  %v54 = vmax.f32 %v52, %v53
  %v55 = vadd.f32 %v54, %v42
  %v56 = vld [vmem:[#allocation2] sm:$0xff]
  %vm57 = vcmask 64512
  %v58 = vsel %vm57, %v55, -inf
  %59 = vmax.xlane.f32.xlu0 %v58
  %v60 = vpop.xlane.xlu0 %59
  %v61 = vmax.f32 %v56, %v60
  %v62 = vsub.f32 %v56, %v61
  %v63 = vmul.f32 %v62, 1.442695
  %v64 = vpow.pop %v63
  %66 = vset.pattern.permute.xlu0 0
  %67 = vperm.xlu0 %66, %v61
  %v68 = vpop.permute.xlu0 %67
  %v70 = vsub.f32 %v55, %v68
  %v71 = vmul.f32 %v70, 1.442695
  %v72 = vpow.pop %v71
  %v73 = vld [vmem:[#allocation3] sm:$0xff]
  %v74 = vmul.f32 %v64, %v73
  %v75 = vsel %vm57, %v72, 0.0
  %76 = vadd.xlane.f32.xlu0 %v75
  %v77 = vpop.xlane.xlu0 %76
  %v78 = vadd.f32 %v74, %v77
  %vm79 = vcmask 7168
  %80 = vst.msk [vmem:[#allocation3] sm:$0xff] %vm79, %v78
  %v81 = vld [vmem:[#allocation4] sm:$0xff]
  %83 = vset.pattern.permute.xlu0 0
  %84 = vperm.xlu0 %83, %v64
  %v85 = vpop.permute.xlu0 %84
  %v87 = vmul.f32 %v85, %v81
  %v88 = vpack.c.bf16 %v72, %v72
  %v90 = vsel %vm57, %v88, 0
  %vm92 = vcmask 1043456
  %v94 = vsel %vm92, %v45, 0
  %96 = vmatpush.bf16.msra.mxu0 0
  %97 = vmatpush.bf16.msra.mxu0 0
  %98 = vmatpush.bf16.msra.mxu0 0
  %99 = vmatpush.bf16.msra.mxu0 0
  %100 = vmatpush.bf16.msra.mxu0 0
  %101 = vmatpush.bf16.msra.mxu0 0
  %102 = vmatpush.bf16.msra.mxu0 0
  %103 = vmatpush.bf16.msra.mxu0 %v94
  %104 = vmatmul.bf16.gmra.mxu0 %v90
  %v105 = vpop.f32.mrf.mxu0
  %v106 = vadd.f32 0.0, %v105
  %v107 = vpop.f32.mrf.mxu0
  %108 = vdwg.mxu0
  %v109 = vadd.f32 %v87, %v106
  %vm110 = vcmask 261120
  %111 = vst.msk [vmem:[#allocation4] sm:$0xff] %vm110, %v109
  %112 = vst.msk [vmem:[#allocation2] sm:$0xff] %vm79, %v61
  %113 = vset.pattern.permute.xlu0 1
  %114 = vperm.xlu0 %113, %v43
  %v115 = vpop.permute.xlu0 %114
  %v117 = vperm.slane %v44, 1
  %v118 = vadd.f32 %v115, %v117
  %v119 = vmul.f32 %v118, 0.2
  %v120 = vmax.f32 %v118, %v119
  %v121 = vadd.f32 %v120, %v42
  %v122 = vld [vmem:[#allocation2] sm:$0xff]
  %v123 = vsel %vm57, %v121, -inf
  %124 = vmax.xlane.f32.xlu0 %v123
  %v125 = vpop.xlane.xlu0 %124
  %v126 = vmax.f32 %v122, %v125
  %v127 = vsub.f32 %v122, %v126
  %v128 = vmul.f32 %v127, 1.442695
  %v129 = vpow.pop %v128
  %131 = vset.pattern.permute.xlu0 1
  %132 = vperm.xlu0 %131, %v126
  %v133 = vpop.permute.xlu0 %132
  %v135 = vsub.f32 %v121, %v133
  %v136 = vmul.f32 %v135, 1.442695
  %v137 = vpow.pop %v136
  %v138 = vld [vmem:[#allocation3] sm:$0xff]
  %v139 = vmul.f32 %v129, %v138
  %v140 = vsel %vm57, %v137, 0.0
  %141 = vadd.xlane.f32.xlu0 %v140
  %v142 = vpop.xlane.xlu0 %141
  %v143 = vadd.f32 %v139, %v142
  %vm144 = vcmask 15368
  %145 = vst.msk [vmem:[#allocation3] sm:$0xff] %vm144, %v143
  %v146 = vld [vmem:[#allocation4] sm:$0xff]
  %148 = vset.pattern.permute.xlu0 1
  %149 = vperm.xlu0 %148, %v129
  %v150 = vpop.permute.xlu0 %149
  %v152 = vmul.f32 %v150, %v146
  %v153 = vpack.c.bf16 %v137, %v137
  %v155 = vunpack.c.l.b16 %v45
  %v156 = vpack.c.b16 %v155, %v155
  %157 = vrot.lane.b32.xlu0 %v156, 96
  %v158 = vpop.permute.xlu0 %157
  %v160 = vsel %vm57, %v153, 0
  %v163 = vsel %vm92, %v158, 0
  %165 = vmatpush.bf16.msra.mxu0 0
  %166 = vmatpush.bf16.msra.mxu0 0
  %167 = vmatpush.bf16.msra.mxu0 0
  %168 = vmatpush.bf16.msra.mxu0 0
  %169 = vmatpush.bf16.msra.mxu0 0
  %170 = vmatpush.bf16.msra.mxu0 0
  %171 = vmatpush.bf16.msra.mxu0 0
  %172 = vmatpush.bf16.msra.mxu0 %v163
  %173 = vmatmul.bf16.gmra.mxu0 %v160
  %v174 = vpop.f32.mrf.mxu0
  %v175 = vadd.f32 0.0, %v174
  %v176 = vpop.f32.mrf.mxu0
  %177 = vdwg.mxu0
  %179 = vrot.lane.b32.xlu0 %v175, 32
  %v180 = vpop.permute.xlu0 %179
  %v182 = vadd.f32 %v152, %v180
  %vm183 = vcmask 523520
  %184 = vst.msk [vmem:[#allocation4] sm:$0xff] %vm183, %v182
  %185 = vst.msk [vmem:[#allocation2] sm:$0xff] %vm144, %v126
  %186 = vset.pattern.permute.xlu0 2
  %187 = vperm.xlu0 %186, %v43
  %v188 = vpop.permute.xlu0 %187
  %v190 = vperm.slane %v44, 2
  %v191 = vadd.f32 %v188, %v190
  %v192 = vmul.f32 %v191, 0.2
  %v193 = vmax.f32 %v191, %v192
  %v194 = vadd.f32 %v193, %v42
  %v195 = vld [vmem:[#allocation2] sm:$0xff]
  %v196 = vsel %vm57, %v194, -inf
  %197 = vmax.xlane.f32.xlu0 %v196
  %v198 = vpop.xlane.xlu0 %197
  %v199 = vmax.f32 %v195, %v198
  %v200 = vsub.f32 %v195, %v199
  %v201 = vmul.f32 %v200, 1.442695
  %v202 = vpow.pop %v201
  %204 = vset.pattern.permute.xlu0 2
  %205 = vperm.xlu0 %204, %v199
  %v206 = vpop.permute.xlu0 %205
  %v208 = vsub.f32 %v194, %v206
  %v209 = vmul.f32 %v208, 1.442695
  %v210 = vpow.pop %v209
  %v211 = vld [vmem:[#allocation3] sm:$0xff]
  %v212 = vmul.f32 %v202, %v211
  %v213 = vsel %vm57, %v210, 0.0
  %214 = vadd.xlane.f32.xlu0 %v213
  %v215 = vpop.xlane.xlu0 %214
  %v216 = vadd.f32 %v212, %v215
  %vm217 = vcmask 23568
  %218 = vst.msk [vmem:[#allocation3] sm:$0xff] %vm217, %v216
  %v219 = vld [vmem:[#allocation4] sm:$0xff]
  %221 = vset.pattern.permute.xlu0 2
  %222 = vperm.xlu0 %221, %v202
  %v223 = vpop.permute.xlu0 %222
  %v225 = vmul.f32 %v223, %v219
  %v226 = vpack.c.bf16 %v210, %v210
  %227 = vrot.lane.b32.xlu0 %v156, 64
  %v228 = vpop.permute.xlu0 %227
  %v230 = vsel %vm57, %v226, 0
  %v233 = vsel %vm92, %v228, 0
  %235 = vmatpush.bf16.msra.mxu0 0
  %236 = vmatpush.bf16.msra.mxu0 0
  %237 = vmatpush.bf16.msra.mxu0 0
  %238 = vmatpush.bf16.msra.mxu0 0
  %239 = vmatpush.bf16.msra.mxu0 0
  %240 = vmatpush.bf16.msra.mxu0 0
  %241 = vmatpush.bf16.msra.mxu0 0
  %242 = vmatpush.bf16.msra.mxu0 %v233
  %243 = vmatmul.bf16.gmra.mxu0 %v230
  %v244 = vpop.f32.mrf.mxu0
  %v245 = vadd.f32 0.0, %v244
  %v246 = vpop.f32.mrf.mxu0
  %247 = vdwg.mxu0
  %249 = vrot.lane.b32.xlu0 %v245, 64
  %v250 = vpop.permute.xlu0 %249
  %v252 = vadd.f32 %v225, %v250
  %vm253 = vcmask 785920
  %254 = vst.msk [vmem:[#allocation4] sm:$0xff] %vm253, %v252
  %255 = vst.msk [vmem:[#allocation2] sm:$0xff] %vm217, %v199
  %256 = vset.pattern.permute.xlu0 3
  %257 = vperm.xlu0 %256, %v43
  %v258 = vpop.permute.xlu0 %257
  %v260 = vperm.slane %v44, 3
  %v261 = vadd.f32 %v258, %v260
  %v262 = vmul.f32 %v261, 0.2
  %v263 = vmax.f32 %v261, %v262
  %v264 = vadd.f32 %v263, %v42
  %v265 = vld [vmem:[#allocation2] sm:$0xff]
  %v266 = vsel %vm57, %v264, -inf
  %267 = vmax.xlane.f32.xlu0 %v266
  %v268 = vpop.xlane.xlu0 %267
  %v269 = vmax.f32 %v265, %v268
  %v270 = vsub.f32 %v265, %v269
  %v271 = vmul.f32 %v270, 1.442695
  %v272 = vpow.pop %v271
  %274 = vset.pattern.permute.xlu0 3
  %275 = vperm.xlu0 %274, %v269
  %v276 = vpop.permute.xlu0 %275
  %v278 = vsub.f32 %v264, %v276
  %v279 = vmul.f32 %v278, 1.442695
  %v280 = vpow.pop %v279
  %v281 = vld [vmem:[#allocation3] sm:$0xff]
  %v282 = vmul.f32 %v272, %v281
  %v283 = vsel %vm57, %v280, 0.0
  %284 = vadd.xlane.f32.xlu0 %v283
  %v285 = vpop.xlane.xlu0 %284
  %v286 = vadd.f32 %v282, %v285
  %vm287 = vcmask 31768
  %288 = vst.msk [vmem:[#allocation3] sm:$0xff] %vm287, %v286
  %v289 = vld [vmem:[#allocation4] sm:$0xff]
  %291 = vset.pattern.permute.xlu0 3
  %292 = vperm.xlu0 %291, %v272
  %v293 = vpop.permute.xlu0 %292
  %v295 = vmul.f32 %v293, %v289
  %v296 = vpack.c.bf16 %v280, %v280
  %297 = vrot.lane.b32.xlu0 %v156, 32
  %v298 = vpop.permute.xlu0 %297
  %v300 = vsel %vm57, %v296, 0
  %v303 = vsel %vm92, %v298, 0
  %305 = vmatpush.bf16.msra.mxu0 0
  %306 = vmatpush.bf16.msra.mxu0 0
  %307 = vmatpush.bf16.msra.mxu0 0
  %308 = vmatpush.bf16.msra.mxu0 0
  %309 = vmatpush.bf16.msra.mxu0 0
  %310 = vmatpush.bf16.msra.mxu0 0
  %311 = vmatpush.bf16.msra.mxu0 0
  %312 = vmatpush.bf16.msra.mxu0 %v303
  %313 = vmatmul.bf16.gmra.mxu0 %v300
  %v314 = vpop.f32.mrf.mxu0
  %v315 = vadd.f32 0.0, %v314
  %v316 = vpop.f32.mrf.mxu0
  %317 = vdwg.mxu0
  %319 = vrot.lane.b32.xlu0 %v315, 96
  %v320 = vpop.permute.xlu0 %319
  %v322 = vadd.f32 %v295, %v320
  %vm323 = vcmask 1048320
  %324 = vst.msk [vmem:[#allocation4] sm:$0xff] %vm323, %v322
  %325 = vst.msk [vmem:[#allocation2] sm:$0xff] %vm287, %v269
  // Predicated region
  $region34: #{gat_model_forward.4} parent=0 // pred_check
    %p326 = pneg %p30
  $region35: #{gat_model_forward.4} parent=0 // pred_check_branch
    %328 = sbr.rel (%p326) target = $region37
  $region36: #{gat_model_forward.4} parent=0 // pred_region
    %v329 = vld [vmem:[#allocation3] sm:$0xff]
    %v330 = vrcp.pop %v329
    %v331 = vld [vmem:[%s4] sm:$0x1]
    %v332 = vld [vmem:[#allocation4] sm:$0xff]
    %334 = vset.pattern.permute.xlu0 0
    %335 = vperm.xlu0 %334, %v330
    %v336 = vpop.permute.xlu0 %335
    %v338 = vmul.f32 %v332, %v336
    %v340 = vperm.slane %v331, 0
    %v342 = vadd.f32 %v338, %v340
    %343 = vst.msk [vmem:[#allocation4] sm:$0xff] %vm110, %v342
    %v344 = vld [vmem:[#allocation4] sm:$0xff]
    %345 = vset.pattern.permute.xlu0 1
    %346 = vperm.xlu0 %345, %v330
    %v347 = vpop.permute.xlu0 %346
    %v349 = vmul.f32 %v344, %v347
    %v350 = vadd.f32 %v349, %v340
    %351 = vst.msk [vmem:[#allocation4] sm:$0xff] %vm183, %v350
    %v352 = vld [vmem:[#allocation4] sm:$0xff]
    %353 = vset.pattern.permute.xlu0 2
    %354 = vperm.xlu0 %353, %v330
    %v355 = vpop.permute.xlu0 %354
    %v357 = vmul.f32 %v352, %v355
    %v358 = vadd.f32 %v357, %v340
    %359 = vst.msk [vmem:[#allocation4] sm:$0xff] %vm253, %v358
    %v360 = vld [vmem:[#allocation4] sm:$0xff]
    %361 = vset.pattern.permute.xlu0 3
    %362 = vperm.xlu0 %361, %v330
    %v363 = vpop.permute.xlu0 %362
    %v365 = vmul.f32 %v360, %v363
    %v366 = vadd.f32 %v365, %v340
    %367 = vst.msk [vmem:[#allocation4] sm:$0xff] %vm323, %v366
    %v368 = vld [vmem:[#allocation4] sm:$0xff]
    %v369 = vmax.f32 %v368, 0.0
    %v370 = vpack.c.bf16 %v369, %v369
    %v371 = vld [vmem:[%s5] sm:$0xf]
    %v372 = vld [vmem:[%s5 + $0x4] sm:$0xf]
    %v373 = vld [vmem:[%s5 + $0x8] sm:$0xf]
    %v374 = vld [vmem:[%s5 + $0xc] sm:$0xf]
    %v375 = vld [vmem:[%s5 + $0x10] sm:$0xf]
    %v376 = vld [vmem:[%s5 + $0x14] sm:$0xf]
    %v377 = vld [vmem:[%s5 + $0x18] sm:$0xf]
    %v378 = vld [vmem:[%s5 + $0x1c] sm:$0xf]
    %v379 = vld [vmem:[%s5 + $0x20] sm:$0xf]
    %v380 = vld [vmem:[%s5 + $0x24] sm:$0xf]
    %v381 = vld [vmem:[%s5 + $0x28] sm:$0xf]
    %v382 = vld [vmem:[%s5 + $0x2c] sm:$0xf]
    %v383 = vld [vmem:[%s5 + $0x30] sm:$0xf]
    %v384 = vld [vmem:[%s5 + $0x34] sm:$0xf]
    %v385 = vld [vmem:[%s5 + $0x38] sm:$0xf]
    %v386 = vld [vmem:[%s5 + $0x3c] sm:$0xf]
    %v403 = vunpack.c.l.b16 %v371
    %v404 = vunpack.c.l.b16 %v372
    %v405 = vunpack.c.l.b16 %v373
    %v406 = vunpack.c.l.b16 %v374
    %v407 = vunpack.c.l.b16 %v375
    %v408 = vunpack.c.l.b16 %v376
    %v409 = vunpack.c.l.b16 %v377
    %v410 = vunpack.c.l.b16 %v378
    %v411 = vunpack.c.l.b16 %v379
    %v412 = vunpack.c.l.b16 %v380
    %v413 = vunpack.c.l.b16 %v381
    %v414 = vunpack.c.l.b16 %v382
    %v415 = vunpack.c.l.b16 %v383
    %v416 = vunpack.c.l.b16 %v384
    %v417 = vunpack.c.l.b16 %v385
    %v418 = vunpack.c.l.b16 %v386
    %v419 = vpack.c.b16 %v404, %v403
    %v420 = vpack.c.b16 %v406, %v405
    %v421 = vpack.c.b16 %v408, %v407
    %v422 = vpack.c.b16 %v410, %v409
    %v423 = vpack.c.b16 %v412, %v411
    %v424 = vpack.c.b16 %v414, %v413
    %v425 = vpack.c.b16 %v416, %v415
    %v426 = vpack.c.b16 %v418, %v417
    %435 = vmatpush.bf16.msra.mxu0 %v426
    %436 = vmatpush.bf16.msra.mxu0 %v425
    %437 = vmatpush.bf16.msra.mxu0 %v424
    %438 = vmatpush.bf16.msra.mxu0 %v423
    %439 = vmatpush.bf16.msra.mxu0 %v422
    %440 = vmatpush.bf16.msra.mxu0 %v421
    %441 = vmatpush.bf16.msra.mxu0 %v420
    %442 = vmatpush.bf16.msra.mxu0 %v419
    %443 = vmatmul.bf16.gmra.mxu0 %v370
    %v444 = vpop.f32.mrf.mxu0
    %v445 = vadd.f32 0.0, %v444
    %v446 = vpop.f32.mrf.mxu0
    %447 = vdwg.mxu0
    %v448 = vpack.c.bf16 %v445, %v445
    %v449 = vld [vmem:[%s6] sm:$0xf]
    %v450 = vld [vmem:[%s6 + $0x4] sm:$0xf]
    %v451 = vld [vmem:[%s6 + $0x8] sm:$0xf]
    %v452 = vld [vmem:[%s6 + $0xc] sm:$0xf]
    %v453 = vld [vmem:[%s6 + $0x10] sm:$0xf]
    %v454 = vld [vmem:[%s6 + $0x14] sm:$0xf]
    %v455 = vld [vmem:[%s6 + $0x18] sm:$0xf]
    %v456 = vld [vmem:[%s6 + $0x1c] sm:$0xf]
    %v457 = vld [vmem:[%s6 + $0x20] sm:$0xf]
    %v458 = vld [vmem:[%s6 + $0x24] sm:$0xf]
    %v459 = vld [vmem:[%s6 + $0x28] sm:$0xf]
    %v460 = vld [vmem:[%s6 + $0x2c] sm:$0xf]
    %v461 = vld [vmem:[%s6 + $0x30] sm:$0xf]
    %v462 = vld [vmem:[%s6 + $0x34] sm:$0xf]
    %v463 = vld [vmem:[%s6 + $0x38] sm:$0xf]
    %v464 = vld [vmem:[%s6 + $0x3c] sm:$0xf]
    %v481 = vunpack.c.l.b16 %v449
    %v482 = vunpack.c.l.b16 %v450
    %v483 = vunpack.c.l.b16 %v451
    %v484 = vunpack.c.l.b16 %v452
    %v485 = vunpack.c.l.b16 %v453
    %v486 = vunpack.c.l.b16 %v454
    %v487 = vunpack.c.l.b16 %v455
    %v488 = vunpack.c.l.b16 %v456
    %v489 = vunpack.c.l.b16 %v457
    %v490 = vunpack.c.l.b16 %v458
    %v491 = vunpack.c.l.b16 %v459
    %v492 = vunpack.c.l.b16 %v460
    %v493 = vunpack.c.l.b16 %v461
    %v494 = vunpack.c.l.b16 %v462
    %v495 = vunpack.c.l.b16 %v463
    %v496 = vunpack.c.l.b16 %v464
    %v497 = vpack.c.b16 %v482, %v481
    %v498 = vpack.c.b16 %v484, %v483
    %v499 = vpack.c.b16 %v486, %v485
    %v500 = vpack.c.b16 %v488, %v487
    %v501 = vpack.c.b16 %v490, %v489
    %v502 = vpack.c.b16 %v492, %v491
    %v503 = vpack.c.b16 %v494, %v493
    %v504 = vpack.c.b16 %v496, %v495
    %513 = vmatpush.bf16.msra.mxu0 %v504
    %514 = vmatpush.bf16.msra.mxu0 %v503
    %515 = vmatpush.bf16.msra.mxu0 %v502
    %516 = vmatpush.bf16.msra.mxu0 %v501
    %517 = vmatpush.bf16.msra.mxu0 %v500
    %518 = vmatpush.bf16.msra.mxu0 %v499
    %519 = vmatpush.bf16.msra.mxu0 %v498
    %520 = vmatpush.bf16.msra.mxu0 %v497
    %521 = vmatmul.bf16.gmra.mxu0 %v448
    %v522 = vpop.f32.mrf.mxu0
    %v523 = vadd.f32 0.0, %v522
    %v524 = vpop.f32.mrf.mxu0
    %525 = vdwg.mxu0
    %526 = vst [vmem:[%s7] sm:$0xf] %v448
    %527 = vxpose.xlu0.b32.start [1/16] %v523, 128
    %528 = vxpose.xlu0.b32.cont [2/16] 0.0, 128
    %529 = vxpose.xlu0.b32.cont [3/16] 0.0, 128
    %530 = vxpose.xlu0.b32.cont [4/16] 0.0, 128
    %531 = vxpose.xlu0.b32.cont [5/16] 0.0, 128
    %532 = vxpose.xlu0.b32.cont [6/16] 0.0, 128
    %533 = vxpose.xlu0.b32.cont [7/16] 0.0, 128
    %534 = vxpose.xlu0.b32.cont [8/16] 0.0, 128
    %535 = vxpose.xlu0.b32.cont [9/16] 0.0, 128
    %536 = vxpose.xlu0.b32.cont [10/16] 0.0, 128
    %537 = vxpose.xlu0.b32.cont [11/16] 0.0, 128
    %538 = vxpose.xlu0.b32.cont [12/16] 0.0, 128
    %539 = vxpose.xlu0.b32.cont [13/16] 0.0, 128
    %540 = vxpose.xlu0.b32.cont [14/16] 0.0, 128
    %541 = vxpose.xlu0.b32.cont [15/16] 0.0, 128
    %542 = vxpose.xlu0.b32.end [16/16] 0.0, 128
    %v543 = vpop.trf.xlu0
    %v544 = vpop.trf.xlu0
    %v545 = vpop.trf.xlu0
    %v546 = vpop.trf.xlu0
    %v547 = vpop.trf.xlu0
    %v548 = vpop.trf.xlu0
    %v549 = vpop.trf.xlu0
    %v550 = vpop.trf.xlu0
    %v551 = vpop.trf.xlu0
    %v552 = vpop.trf.xlu0
    %v553 = vpop.trf.xlu0
    %v554 = vpop.trf.xlu0
    %v555 = vpop.trf.xlu0
    %v556 = vpop.trf.xlu0
    %v557 = vpop.trf.xlu0
    %v558 = vpop.trf.xlu0
    %vm559 = vcmask 57344
    %560 = vst.msk [vmem:[%s8] sm:$0x1] %vm559, %v543
    %562 = vrot.lane.b32.xlu0 %v523, 127
    %v563 = vpop.permute.xlu0 %562
    %565 = vst.msk [vmem:[%s9] sm:$0xff] %vm79, %v563
  $region37: #{gat_model_forward.4} parent=0 // pred_fallthru
    _
  // Predicated region
  $region38: #{gat_model_forward.4} parent=0 // pred_check
    _
  $region39: #{gat_model_forward.4} parent=0 // pred_check_branch
    %567 = sbr.rel (0) target = $region41
  $region40: #{gat_model_forward.4} parent=0 // pred_region
    _
  $region41: #{gat_model_forward.4} parent=0 // pred_fallthru
    _
  // Predicated region
  $region42: #{gat_model_forward.4} parent=0 // pred_check
    _
  $region43: #{gat_model_forward.4} parent=0 // pred_check_branch
    %569 = sbr.rel (0) target = $region45
  $region44: #{gat_model_forward.4} parent=0 // pred_region
    _
  $region45: #{gat_model_forward.4} parent=0 // pred_fallthru
    _
  // Predicated region
  $region46: #{gat_model_forward.4} parent=0 // pred_check
    _
  $region47: #{gat_model_forward.4} parent=0 // pred_check_branch
    %571 = sbr.rel (0) target = $region49
  $region48: #{gat_model_forward.4} parent=0 // pred_region
    _
  $region49: #{gat_model_forward.4} parent=0 // pred_fallthru
    _
  // Predicated region
  $region50: #{gat_model_forward.4} parent=0 // pred_check
    _
  $region51: #{gat_model_forward.4} parent=0 // pred_check_branch
    %573 = sbr.rel (0) target = $region53
  $region52: #{gat_model_forward.4} parent=0 // pred_region
    _
  $region53: #{gat_model_forward.4} parent=0 // pred_fallthru
    _
  // Predicated region
  $region54: #{gat_model_forward.4} parent=0 // pred_check
    _
  $region55: #{gat_model_forward.4} parent=0 // pred_check_branch
    %575 = sbr.rel (0) target = $region57
  $region56: #{gat_model_forward.4} parent=0 // pred_region
    _
  $region57: #{gat_model_forward.4} parent=0 // pred_fallthru
    _
  // Predicated region
  $region58: #{gat_model_forward.4} parent=0 // pred_check
    _
  $region59: #{gat_model_forward.4} parent=0 // pred_check_branch
    %577 = sbr.rel (0) target = $region61
  $region60: #{gat_model_forward.4} parent=0 // pred_region
    _
  $region61: #{gat_model_forward.4} parent=0 // pred_fallthru
    _

</llo_original>
